<compile_context>
chip_gen: v7x
topology: tpu7x:2x2x1
jax: 0.10.0
libtpu: 0.0.40
codegen_flags: <defaults>
</compile_context>

<pallas_src>
import functools

import jax
import jax.numpy as jnp
from jax import lax
from jax.experimental import pallas as pl
from jax.experimental.pallas import tpu as pltpu

LANE = 128      # lane width (hidden-dim padding target)
SUBLANE = 8     # sublane width (row padding target)


# ------------------------------ small helpers ------------------------------ #

def _rup(x, m):
    return (x + m - 1) // m * m


def _pad2d(x, rows, cols, value=0):
    r, c = x.shape
    return jnp.pad(x, ((0, rows - r), (0, cols - c)), constant_values=value)


def _pad1d(x, n, value=0):
    return jnp.pad(x, (0, n - x.shape[0]), constant_values=value)


def _full_spec(shape):
    # whole-array single block (block_shape == array shape -> no (8,128) constraint)
    return pl.BlockSpec(shape, lambda *_: (0,) * len(shape))


def _small_k_matmul(x, w):
    # x: [R, K] f32 (K tiny & unpadded), w: [K, H] f32.
    # Outer-product accumulation on the VPU: exact f32, no MXU shape constraints,
    # and no 128-lane padding of the tiny feature dims in HBM.
    acc = x[:, 0:1] * w[0:1, :]
    for k in range(1, x.shape[1]):
        acc = acc + x[:, k:k + 1] * w[k:k + 1, :]
    return acc


# ------------------------------ fused kernel ------------------------------- #

def _fused_forward_kernel(
        num_edges,
        # data
        v_ref, e_ref, g_ref, b_ref,
        src_ref, dst_ref,            # SMEM int32 [ne]
        vgb_ref, egb_ref,            # VMEM int32 [1, nv_p] / [1, ne_p]
        inv_vsz_ref, inv_esz_ref,    # VMEM f32 [g_p, 1]  (precomputed 1/count)
        # parameters
        wv_ref, bv_ref, we_ref, be_ref,
        wu1_ref, wu2_ref, bu_ref,
        wp_ref, bp_ref,
        wg1v_ref, wg1e_ref, wg1g_ref, wg1b_ref, bg1_ref,
        wg2_ref, bg2_ref,
        # outputs
        policy_ref, value_ref,
        # scratch
        hv_ref, he_ref, agg_ref):
    f32, bf16 = jnp.float32, jnp.bfloat16
    nv_p = hv_ref.shape[0]
    ne_p = he_ref.shape[0]
    g_p = g_ref.shape[0]

    # 1) node / edge embeddings: tiny-K f32 on the VPU, bias + ReLU.
    hv = jnp.maximum(_small_k_matmul(v_ref[...], wv_ref[...]) + bv_ref[...], 0.0)
    he = jnp.maximum(_small_k_matmul(e_ref[...], we_ref[...]) + be_ref[...], 0.0)
    hv_ref[...] = hv
    he_ref[...] = he

    # 2-3) index-based gather + message multiply + scatter-add (no [Ne,Nv] one-hots).
    #      Sequential loop over real edges only; padded rows are never touched.
    agg_ref[...] = jnp.zeros_like(agg_ref)

    def edge_body(i, carry):
        s = src_ref[i]                                            # source node index
        d = dst_ref[i]                                            # target node index
        msg = he_ref[pl.ds(i, 1), :] * hv_ref[pl.ds(s, 1), :]     # [1, H] message
        agg_ref[pl.ds(d, 1), :] = agg_ref[pl.ds(d, 1), :] + msg   # scatter-add
        return carry

    lax.fori_loop(0, num_edges, edge_body, 0)

    # 4) node update: concat eliminated -> two bf16 MXU matmuls into one f32 acc.
    hv2 = jnp.dot(hv.astype(bf16), wu1_ref[...], preferred_element_type=f32)
    hv2 = hv2 + jnp.dot(agg_ref[...].astype(bf16), wu2_ref[...],
                        preferred_element_type=f32)
    hv2 = jnp.maximum(hv2 + bu_ref[...], 0.0)                     # [Nv, H]

    # 5) policy head: VPU multiply + lane reduce against transposed [1,H] weight ->
    #    narrow [Nv, 1] output (no 128x writeback).
    policy_ref[...] = (jnp.sum(hv2 * wp_ref[...], axis=1, keepdims=True)
                       + bp_ref[...]).astype(policy_ref.dtype)

    # 6) per-graph mean pooling of node states (linear-size one-hot; inverse count
    #    precomputed outside the kernel; padded nodes carry graph id -1 -> excluded).
    growv = lax.broadcasted_iota(jnp.int32, (g_p, nv_p), 0)
    vpool = (growv == vgb_ref[...]).astype(bf16)                  # [G, Nv]
    v_pooled = (jnp.dot(vpool, hv2.astype(bf16), preferred_element_type=f32)
                * inv_vsz_ref[...])                               # [G, H]

    # 7) per-graph mean pooling of edge states (padded edges carry graph id -1).
    growe = lax.broadcasted_iota(jnp.int32, (g_p, ne_p), 0)
    epool = (growe == egb_ref[...]).astype(bf16)                  # [G, Ne]
    e_pooled = (jnp.dot(epool, he.astype(bf16), preferred_element_type=f32)
                * inv_esz_ref[...])                               # [G, H]

    # 8) value head: concat eliminated -> 2 MXU matmuls + 2 tiny-K VPU matmuls into
    #    one f32 accumulator, then a lane-reduce head -> [G, 1] output.
    hg = jnp.dot(v_pooled.astype(bf16), wg1v_ref[...], preferred_element_type=f32)
    hg = hg + jnp.dot(e_pooled.astype(bf16), wg1e_ref[...], preferred_element_type=f32)
    hg = hg + _small_k_matmul(g_ref[...], wg1g_ref[...])
    hg = hg + _small_k_matmul(b_ref[...], wg1b_ref[...])
    hg = jnp.maximum(hg + bg1_ref[...], 0.0)                      # [G, H]
    value_ref[...] = (jnp.sum(hg * wg2_ref[...], axis=1, keepdims=True)
                      + bg2_ref[...]).astype(value_ref.dtype)


# ------------------------------- parameters -------------------------------- #

def make_params(key, dv, de, dg, db, hidden):
    def glorot(k, shape):
        fan_in, fan_out = shape
        lim = (6.0 / (fan_in + fan_out)) ** 0.5
        return jax.random.uniform(k, shape, jnp.float32, -lim, lim)

    def bias(k, n):
        return jax.random.uniform(k, (n,), jnp.float32, -0.1, 0.1)

    ks = jax.random.split(key, 12)
    return {
        "w_v": glorot(ks[0], (dv, hidden)),          "b_v": bias(ks[6], hidden),
        "w_e": glorot(ks[1], (de, hidden)),          "b_e": bias(ks[7], hidden),
        "w_u": glorot(ks[2], (2 * hidden, hidden)),  "b_u": bias(ks[8], hidden),
        "w_p": glorot(ks[3], (hidden, 1)),           "b_p": bias(ks[9], 1),
        "w_g1": glorot(ks[4], (2 * hidden + dg + db, hidden)),
        "b_g1": bias(ks[10], hidden),
        "w_g2": glorot(ks[5], (hidden, 1)),          "b_g2": bias(ks[11], 1),
    }


def prepare_fused_params(params, dv, de, dg, db, hidden):
    """One-time: split concat-weights, pad only the hidden dim, cast MXU weights."""
    h = hidden
    hp = _rup(h, LANE)
    bf16, f32 = jnp.bfloat16, jnp.float32

    def wide(w):                     # [h, h] -> [hp, hp] bf16 (MXU matmul weights)
        return _pad2d(w, hp, hp).astype(bf16)

    def feat(w):                     # tiny-K first layer: keep K, pad N -> hp, f32 (VPU)
        return _pad2d(w, w.shape[0], hp).astype(f32)

    def head_t(w):                   # [h, 1] head -> transposed [1, hp] f32 (lane reduce)
        return _pad2d(w.reshape(1, -1), 1, hp).astype(f32)

    def brow(b, n):
        return _pad2d(b.reshape(1, -1), 1, n).astype(f32)

    w_u, w_g1 = params["w_u"], params["w_g1"]
    return {
        "wv": feat(params["w_v"]),   "bv": brow(params["b_v"], hp),
        "we": feat(params["w_e"]),   "be": brow(params["b_e"], hp),
        "wu1": wide(w_u[:h]),        "wu2": wide(w_u[h:2 * h]),
        "bu": brow(params["b_u"], hp),
        "wp": head_t(params["w_p"]), "bp": brow(params["b_p"], 1),
        "wg1v": wide(w_g1[:h]),      "wg1e": wide(w_g1[h:2 * h]),
        "wg1g": feat(w_g1[2 * h:2 * h + dg]),
        "wg1b": feat(w_g1[2 * h + dg:]),
        "bg1": brow(params["b_g1"], hp),
        "wg2": head_t(params["w_g2"]), "bg2": brow(params["b_g2"], 1),
    }


# ------------------------------ Wrapper.forward ----------------------------- #

def fused_forward(fparams, vbatched, ebatched, conn, variable_nodes_sizes,
                  v_graph_belonging, e_graph_belonging, gbatched, bbatched):
    nv, dv = vbatched.shape
    ne, de = ebatched.shape
    g, dg = gbatched.shape
    db = bbatched.shape[1]
    hp = fparams["wu1"].shape[1]

    nv_p, ne_p, g_p = _rup(nv, SUBLANE), _rup(ne, SUBLANE), _rup(g, SUBLANE)

    f32 = jnp.float32
    # activations: rows padded to 8 sublanes; feature dims left UNPADDED (full-array
    # blocks are exempt from the (8,128) rule) -> minimal input DMA.
    v_in = _pad2d(vbatched.astype(f32), nv_p, dv)
    e_in = _pad2d(ebatched.astype(f32), ne_p, de)
    g_in = _pad2d(gbatched.astype(f32), g_p, dg)
    b_in = _pad2d(bbatched.astype(f32), g_p, db)

    # edge indices -> SMEM (only real edges are ever looped over)
    src = conn[:, 0].astype(jnp.int32)
    dst = conn[:, 1].astype(jnp.int32)
    # graph-membership rows for pooling one-hots; padded entries = -1 (never selected)
    vgb = _pad1d(v_graph_belonging.astype(jnp.int32), nv_p, -1).reshape(1, nv_p)
    egb = _pad1d(e_graph_belonging.astype(jnp.int32), ne_p, -1).reshape(1, ne_p)

    # inverse pooling counts precomputed outside the kernel
    inv_vsz = 1.0 / jnp.maximum(variable_nodes_sizes.astype(f32), 1.0)
    e_cnt = jax.ops.segment_sum(jnp.ones((ne,), f32), e_graph_belonging, num_segments=g)
    inv_esz = 1.0 / jnp.maximum(e_cnt, 1.0)
    inv_vsz = _pad1d(inv_vsz, g_p, 1.0).reshape(g_p, 1)
    inv_esz = _pad1d(inv_esz, g_p, 1.0).reshape(g_p, 1)

    operands = (
        v_in, e_in, g_in, b_in, src, dst, vgb, egb, inv_vsz, inv_esz,
        fparams["wv"], fparams["bv"], fparams["we"], fparams["be"],
        fparams["wu1"], fparams["wu2"], fparams["bu"],
        fparams["wp"], fparams["bp"],
        fparams["wg1v"], fparams["wg1e"], fparams["wg1g"], fparams["wg1b"], fparams["bg1"],
        fparams["wg2"], fparams["bg2"],
    )
    smem_idx = {4, 5}   # src, dst live in SMEM (read as scalars inside the edge loop)
    in_specs = [
        pl.BlockSpec(memory_space=pltpu.MemorySpace.SMEM) if i in smem_idx
        else _full_spec(x.shape)
        for i, x in enumerate(operands)
    ]

    policy_pad, value_pad = pl.pallas_call(
        functools.partial(_fused_forward_kernel, ne),
        out_shape=(jax.ShapeDtypeStruct((nv_p, 1), jnp.float32),
                   jax.ShapeDtypeStruct((g_p, 1), jnp.float32)),
        grid=(1,),
        in_specs=in_specs,
        out_specs=(_full_spec((nv_p, 1)), _full_spec((g_p, 1))),
        scratch_shapes=[pltpu.VMEM((nv_p, hp), jnp.float32),   # hv
                        pltpu.VMEM((ne_p, hp), jnp.float32),   # he
                        pltpu.VMEM((nv_p, hp), jnp.float32)],  # agg
        compiler_params=pltpu.CompilerParams(
            dimension_semantics=("arbitrary",),
            vmem_limit_bytes=32 * 1024 * 1024),
    )(*operands)

    # Wrapper semantics: (policy.flatten(), value.flatten())
    return policy_pad[:nv, 0], value_pad[:g, 0]


# -------------------------- pure-JAX reference (f32) ------------------------ #

def reference_forward(params, vb, eb, conn, vsizes, vgb, egb, gb, bb):
    hv = jax.nn.relu(vb @ params["w_v"] + params["b_v"])
    he = jax.nn.relu(eb @ params["w_e"] + params["b_e"])
    msg = he * hv[conn[:, 0]]
    agg = jax.ops.segment_sum(msg, conn[:, 1], num_segments=vb.shape[0])
    hv2 = jax.nn.relu(jnp.concatenate([hv, agg], -1) @ params["w_u"] + params["b_u"])
    policy = hv2 @ params["w_p"] + params["b_p"]
    g = gb.shape[0]
    v_pooled = (jax.ops.segment_sum(hv2, vgb, num_segments=g)
                / jnp.maximum(vsizes.astype(jnp.float32), 1.0)[:, None])
    e_cnt = jnp.maximum(
        jax.ops.segment_sum(jnp.ones((eb.shape[0],), jnp.float32), egb, num_segments=g), 1.0)
    e_pooled = jax.ops.segment_sum(he, egb, num_segments=g) / e_cnt[:, None]
    gfeat = jnp.concatenate([v_pooled, e_pooled, gb, bb], -1)
    hg = jax.nn.relu(gfeat @ params["w_g1"] + params["b_g1"])
    value = hg @ params["w_g2"] + params["b_g2"]
    return policy.reshape(-1), value.reshape(-1)


# ----------------------------------- main ----------------------------------- #

if __name__ == "__main__":
    # Small synthetic shapes: 2 graphs, 4 variable nodes each, 8 edges each.
    G = 2
    NV_PER_G = 4
    NE_PER_G = 8
    NV = G * NV_PER_G            # 8 variable nodes total
    NE = G * NE_PER_G            # 16 edges total
    DV, DE, DG, DB = 6, 3, 4, 2
    HIDDEN = 32

    key = jax.random.PRNGKey(0)
    k_v, k_e, k_g, k_b, k_c, k_p = jax.random.split(key, 6)

    vbatched = jax.random.normal(k_v, (NV, DV), jnp.float32)
    ebatched = jax.random.normal(k_e, (NE, DE), jnp.float32)
    gbatched = jax.random.normal(k_g, (G, DG), jnp.float32)
    bbatched = jax.random.normal(k_b, (G, DB), jnp.float32)

    # connectivity: edges of graph g connect nodes within that graph's node block
    src = jax.random.randint(k_c, (NE,), 0, NV_PER_G)
    dst = jax.random.randint(jax.random.fold_in(k_c, 1), (NE,), 0, NV_PER_G)
    graph_offsets = jnp.repeat(jnp.arange(G, dtype=jnp.int32) * NV_PER_G, NE_PER_G)
    conn = jnp.stack([src.astype(jnp.int32) + graph_offsets,
                      dst.astype(jnp.int32) + graph_offsets], axis=1)        # [NE, 2]

    variable_nodes_sizes = jnp.full((G,), NV_PER_G, jnp.int32)
    v_graph_belonging = jnp.repeat(jnp.arange(G, dtype=jnp.int32), NV_PER_G)  # [NV]
    e_graph_belonging = jnp.repeat(jnp.arange(G, dtype=jnp.int32), NE_PER_G)  # [NE]

    params = make_params(k_p, DV, DE, DG, DB, HIDDEN)
    fparams = prepare_fused_params(params, DV, DE, DG, DB, HIDDEN)  # hoisted casts/pads

    fwd = jax.jit(functools.partial(fused_forward, fparams))
    policy, value = fwd(vbatched, ebatched, conn, variable_nodes_sizes,
                        v_graph_belonging, e_graph_belonging, gbatched, bbatched)
    policy, value = jax.block_until_ready((policy, value))

    assert policy.shape == (NV,), policy.shape
    assert value.shape == (G,), value.shape
    assert bool(jnp.all(jnp.isfinite(policy))) and bool(jnp.all(jnp.isfinite(value)))

    # correctness vs. pure-JAX f32 reference (bf16 MXU weights -> loose tolerance)
    ref_policy, ref_value = reference_forward(
        params, vbatched, ebatched, conn, variable_nodes_sizes,
        v_graph_belonging, e_graph_belonging, gbatched, bbatched)
    assert bool(jnp.allclose(policy, ref_policy, atol=5e-2, rtol=5e-2)), (
        "policy mismatch", jnp.max(jnp.abs(policy - ref_policy)))
    assert bool(jnp.allclose(value, ref_value, atol=5e-2, rtol=5e-2)), (
        "value mismatch", jnp.max(jnp.abs(value - ref_value)))

    print("KERNEL_OK")
</pallas_src>

<mosaic_0001>
module attributes {stable_mosaic.version = 11 : i64} {
  func.func private @main(%arg0: i32) attributes {dimension_semantics = [#tpu.dimension_semantics<core_parallel>], iteration_bounds = array<i64: 2>, tpu.core_type = #tpu.core_type<sc_scalar_subcore>, window_params = []} {
    return
  }
}

module attributes {stable_mosaic.version = 11 : i64} {
  func.func private @main(%arg0: i32) attributes {dimension_semantics = [#tpu.dimension_semantics<core_parallel>], iteration_bounds = array<i64: 2>, tpu.core_type = #tpu.core_type<sc_scalar_subcore>, window_params = []} {
    return
  }
}

module attributes {stable_mosaic.version = 11 : i64} {
  func.func @_fused_forward_kernel(%arg0: i32, %arg1: memref<8x6xf32, #tpu.memory_space<vmem>>, %arg2: memref<16x3xf32, #tpu.memory_space<vmem>>, %arg3: memref<8x4xf32, #tpu.memory_space<vmem>>, %arg4: memref<8x2xf32, #tpu.memory_space<vmem>>, %arg5: memref<16xi32, #tpu.memory_space<smem>>, %arg6: memref<16xi32, #tpu.memory_space<smem>>, %arg7: memref<1x8xi32, #tpu.memory_space<vmem>>, %arg8: memref<1x16xi32, #tpu.memory_space<vmem>>, %arg9: memref<8x1xf32, #tpu.memory_space<vmem>>, %arg10: memref<8x1xf32, #tpu.memory_space<vmem>>, %arg11: memref<6x128xf32, #tpu.memory_space<vmem>>, %arg12: memref<1x128xf32, #tpu.memory_space<vmem>>, %arg13: memref<3x128xf32, #tpu.memory_space<vmem>>, %arg14: memref<1x128xf32, #tpu.memory_space<vmem>>, %arg15: memref<128x128xbf16, #tpu.memory_space<vmem>>, %arg16: memref<128x128xbf16, #tpu.memory_space<vmem>>, %arg17: memref<1x128xf32, #tpu.memory_space<vmem>>, %arg18: memref<1x128xf32, #tpu.memory_space<vmem>>, %arg19: memref<1x1xf32, #tpu.memory_space<vmem>>, %arg20: memref<128x128xbf16, #tpu.memory_space<vmem>>, %arg21: memref<128x128xbf16, #tpu.memory_space<vmem>>, %arg22: memref<4x128xf32, #tpu.memory_space<vmem>>, %arg23: memref<2x128xf32, #tpu.memory_space<vmem>>, %arg24: memref<1x128xf32, #tpu.memory_space<vmem>>, %arg25: memref<1x128xf32, #tpu.memory_space<vmem>>, %arg26: memref<1x1xf32, #tpu.memory_space<vmem>>, %arg27: memref<8x1xf32, #tpu.memory_space<vmem>>, %arg28: memref<8x1xf32, #tpu.memory_space<vmem>>, %arg29: memref<8x128xf32, #tpu.memory_space<vmem>>, %arg30: memref<16x128xf32, #tpu.memory_space<vmem>>, %arg31: memref<8x128xf32, #tpu.memory_space<vmem>>) attributes {dimension_semantics = [#tpu.dimension_semantics<arbitrary>], iteration_bounds = array<i64: 1>, scalar_prefetch = 0 : i64, scratch_operands = 3 : i64, tpu.core_type = #tpu.core_type<tc>, window_params = [{pipeline_mode = #tpu.pipeline_mode<synchronous>, transform_indices = @transform_0, window_bounds = array<i64: 8, 6>}, {pipeline_mode = #tpu.pipeline_mode<synchronous>, transform_indices = @transform_1, window_bounds = array<i64: 16, 3>}, {pipeline_mode = #tpu.pipeline_mode<synchronous>, transform_indices = @transform_2, window_bounds = array<i64: 8, 4>}, {pipeline_mode = #tpu.pipeline_mode<synchronous>, transform_indices = @transform_3, window_bounds = array<i64: 8, 2>}, {transform_indices = @transform_4, window_bounds = array<i64: 16>}, {transform_indices = @transform_5, window_bounds = array<i64: 16>}, {pipeline_mode = #tpu.pipeline_mode<synchronous>, transform_indices = @transform_6, window_bounds = array<i64: 1, 8>}, {pipeline_mode = #tpu.pipeline_mode<synchronous>, transform_indices = @transform_7, window_bounds = array<i64: 1, 16>}, {pipeline_mode = #tpu.pipeline_mode<synchronous>, transform_indices = @transform_8, window_bounds = array<i64: 8, 1>}, {pipeline_mode = #tpu.pipeline_mode<synchronous>, transform_indices = @transform_9, window_bounds = array<i64: 8, 1>}, {pipeline_mode = #tpu.pipeline_mode<synchronous>, transform_indices = @transform_10, window_bounds = array<i64: 6, 128>}, {pipeline_mode = #tpu.pipeline_mode<synchronous>, transform_indices = @transform_11, window_bounds = array<i64: 1, 128>}, {pipeline_mode = #tpu.pipeline_mode<synchronous>, transform_indices = @transform_12, window_bounds = array<i64: 3, 128>}, {pipeline_mode = #tpu.pipeline_mode<synchronous>, transform_indices = @transform_13, window_bounds = array<i64: 1, 128>}, {pipeline_mode = #tpu.pipeline_mode<synchronous>, transform_indices = @transform_14, window_bounds = array<i64: 128, 128>}, {pipeline_mode = #tpu.pipeline_mode<synchronous>, transform_indices = @transform_15, window_bounds = array<i64: 128, 128>}, {pipeline_mode = #tpu.pipeline_mode<synchronous>, transform_indices = @transform_16, window_bounds = array<i64: 1, 128>}, {pipeline_mode = #tpu.pipeline_mode<synchronous>, transform_indices = @transform_17, window_bounds = array<i64: 1, 128>}, {pipeline_mode = #tpu.pipeline_mode<synchronous>, transform_indices = @transform_18, window_bounds = array<i64: 1, 1>}, {pipeline_mode = #tpu.pipeline_mode<synchronous>, transform_indices = @transform_19, window_bounds = array<i64: 128, 128>}, {pipeline_mode = #tpu.pipeline_mode<synchronous>, transform_indices = @transform_20, window_bounds = array<i64: 128, 128>}, {pipeline_mode = #tpu.pipeline_mode<synchronous>, transform_indices = @transform_21, window_bounds = array<i64: 4, 128>}, {pipeline_mode = #tpu.pipeline_mode<synchronous>, transform_indices = @transform_22, window_bounds = array<i64: 2, 128>}, {pipeline_mode = #tpu.pipeline_mode<synchronous>, transform_indices = @transform_23, window_bounds = array<i64: 1, 128>}, {pipeline_mode = #tpu.pipeline_mode<synchronous>, transform_indices = @transform_24, window_bounds = array<i64: 1, 128>}, {pipeline_mode = #tpu.pipeline_mode<synchronous>, transform_indices = @transform_25, window_bounds = array<i64: 1, 1>}, {pipeline_mode = #tpu.pipeline_mode<synchronous>, transform_indices = @transform_26, window_bounds = array<i64: 8, 1>}, {pipeline_mode = #tpu.pipeline_mode<synchronous>, transform_indices = @transform_27, window_bounds = array<i64: 8, 1>}]} {
    %c0 = arith.constant 0 : index
    %c0_0 = arith.constant 0 : index
    %0 = vector.load %arg1[%c0, %c0_0] : memref<8x6xf32, #tpu.memory_space<vmem>>, vector<8x6xf32>
    %c0_1 = arith.constant 0 : index
    %c0_2 = arith.constant 0 : index
    %1 = vector.load %arg11[%c0_1, %c0_2] : memref<6x128xf32, #tpu.memory_space<vmem>>, vector<6x128xf32>
    %2 = vector.extract_strided_slice %0 {offsets = [0, 0], sizes = [8, 1], strides = [1, 1]} : vector<8x6xf32> to vector<8x1xf32>
    %3 = vector.extract_strided_slice %1 {offsets = [0, 0], sizes = [1, 128], strides = [1, 1]} : vector<6x128xf32> to vector<1x128xf32>
    %4 = vector.broadcast %2 : vector<8x1xf32> to vector<8x128xf32>
    %5 = vector.broadcast %3 : vector<1x128xf32> to vector<8x128xf32>
    %6 = arith.mulf %4, %5 : vector<8x128xf32>
    %7 = vector.extract_strided_slice %0 {offsets = [0, 1], sizes = [8, 1], strides = [1, 1]} : vector<8x6xf32> to vector<8x1xf32>
    %8 = vector.extract_strided_slice %1 {offsets = [1, 0], sizes = [1, 128], strides = [1, 1]} : vector<6x128xf32> to vector<1x128xf32>
    %9 = vector.broadcast %7 : vector<8x1xf32> to vector<8x128xf32>
    %10 = vector.broadcast %8 : vector<1x128xf32> to vector<8x128xf32>
    %11 = arith.mulf %9, %10 : vector<8x128xf32>
    %12 = arith.addf %6, %11 : vector<8x128xf32>
    %13 = vector.extract_strided_slice %0 {offsets = [0, 2], sizes = [8, 1], strides = [1, 1]} : vector<8x6xf32> to vector<8x1xf32>
    %14 = vector.extract_strided_slice %1 {offsets = [2, 0], sizes = [1, 128], strides = [1, 1]} : vector<6x128xf32> to vector<1x128xf32>
    %15 = vector.broadcast %13 : vector<8x1xf32> to vector<8x128xf32>
    %16 = vector.broadcast %14 : vector<1x128xf32> to vector<8x128xf32>
    %17 = arith.mulf %15, %16 : vector<8x128xf32>
    %18 = arith.addf %12, %17 : vector<8x128xf32>
    %19 = vector.extract_strided_slice %0 {offsets = [0, 3], sizes = [8, 1], strides = [1, 1]} : vector<8x6xf32> to vector<8x1xf32>
    %20 = vector.extract_strided_slice %1 {offsets = [3, 0], sizes = [1, 128], strides = [1, 1]} : vector<6x128xf32> to vector<1x128xf32>
    %21 = vector.broadcast %19 : vector<8x1xf32> to vector<8x128xf32>
    %22 = vector.broadcast %20 : vector<1x128xf32> to vector<8x128xf32>
    %23 = arith.mulf %21, %22 : vector<8x128xf32>
    %24 = arith.addf %18, %23 : vector<8x128xf32>
    %25 = vector.extract_strided_slice %0 {offsets = [0, 4], sizes = [8, 1], strides = [1, 1]} : vector<8x6xf32> to vector<8x1xf32>
    %26 = vector.extract_strided_slice %1 {offsets = [4, 0], sizes = [1, 128], strides = [1, 1]} : vector<6x128xf32> to vector<1x128xf32>
    %27 = vector.broadcast %25 : vector<8x1xf32> to vector<8x128xf32>
    %28 = vector.broadcast %26 : vector<1x128xf32> to vector<8x128xf32>
    %29 = arith.mulf %27, %28 : vector<8x128xf32>
    %30 = arith.addf %24, %29 : vector<8x128xf32>
    %31 = vector.extract_strided_slice %0 {offsets = [0, 5], sizes = [8, 1], strides = [1, 1]} : vector<8x6xf32> to vector<8x1xf32>
    %32 = vector.extract_strided_slice %1 {offsets = [5, 0], sizes = [1, 128], strides = [1, 1]} : vector<6x128xf32> to vector<1x128xf32>
    %33 = vector.broadcast %31 : vector<8x1xf32> to vector<8x128xf32>
    %34 = vector.broadcast %32 : vector<1x128xf32> to vector<8x128xf32>
    %35 = arith.mulf %33, %34 : vector<8x128xf32>
    %36 = arith.addf %30, %35 : vector<8x128xf32>
    %c0_3 = arith.constant 0 : index
    %c0_4 = arith.constant 0 : index
    %37 = vector.load %arg12[%c0_3, %c0_4] : memref<1x128xf32, #tpu.memory_space<vmem>>, vector<1x128xf32>
    %38 = vector.broadcast %37 : vector<1x128xf32> to vector<8x128xf32>
    %39 = arith.addf %36, %38 : vector<8x128xf32>
    %cst = arith.constant 0.000000e+00 : f32
    %40 = vector.broadcast %cst : f32 to vector<8x128xf32>
    %41 = arith.maximumf %39, %40 : vector<8x128xf32>
    %c0_5 = arith.constant 0 : index
    %c0_6 = arith.constant 0 : index
    %42 = vector.load %arg2[%c0_5, %c0_6] : memref<16x3xf32, #tpu.memory_space<vmem>>, vector<16x3xf32>
    %c0_7 = arith.constant 0 : index
    %c0_8 = arith.constant 0 : index
    %43 = vector.load %arg13[%c0_7, %c0_8] : memref<3x128xf32, #tpu.memory_space<vmem>>, vector<3x128xf32>
    %44 = vector.extract_strided_slice %42 {offsets = [0, 0], sizes = [16, 1], strides = [1, 1]} : vector<16x3xf32> to vector<16x1xf32>
    %45 = vector.extract_strided_slice %43 {offsets = [0, 0], sizes = [1, 128], strides = [1, 1]} : vector<3x128xf32> to vector<1x128xf32>
    %46 = vector.broadcast %44 : vector<16x1xf32> to vector<16x128xf32>
    %47 = vector.broadcast %45 : vector<1x128xf32> to vector<16x128xf32>
    %48 = arith.mulf %46, %47 : vector<16x128xf32>
    %49 = vector.extract_strided_slice %42 {offsets = [0, 1], sizes = [16, 1], strides = [1, 1]} : vector<16x3xf32> to vector<16x1xf32>
    %50 = vector.extract_strided_slice %43 {offsets = [1, 0], sizes = [1, 128], strides = [1, 1]} : vector<3x128xf32> to vector<1x128xf32>
    %51 = vector.broadcast %49 : vector<16x1xf32> to vector<16x128xf32>
    %52 = vector.broadcast %50 : vector<1x128xf32> to vector<16x128xf32>
    %53 = arith.mulf %51, %52 : vector<16x128xf32>
    %54 = arith.addf %48, %53 : vector<16x128xf32>
    %55 = vector.extract_strided_slice %42 {offsets = [0, 2], sizes = [16, 1], strides = [1, 1]} : vector<16x3xf32> to vector<16x1xf32>
    %56 = vector.extract_strided_slice %43 {offsets = [2, 0], sizes = [1, 128], strides = [1, 1]} : vector<3x128xf32> to vector<1x128xf32>
    %57 = vector.broadcast %55 : vector<16x1xf32> to vector<16x128xf32>
    %58 = vector.broadcast %56 : vector<1x128xf32> to vector<16x128xf32>
    %59 = arith.mulf %57, %58 : vector<16x128xf32>
    %60 = arith.addf %54, %59 : vector<16x128xf32>
    %c0_9 = arith.constant 0 : index
    %c0_10 = arith.constant 0 : index
    %61 = vector.load %arg14[%c0_9, %c0_10] : memref<1x128xf32, #tpu.memory_space<vmem>>, vector<1x128xf32>
    %62 = vector.broadcast %61 : vector<1x128xf32> to vector<16x128xf32>
    %63 = arith.addf %60, %62 : vector<16x128xf32>
    %cst_11 = arith.constant 0.000000e+00 : f32
    %64 = vector.broadcast %cst_11 : f32 to vector<16x128xf32>
    %65 = arith.maximumf %63, %64 : vector<16x128xf32>
    %c0_12 = arith.constant 0 : index
    %c0_13 = arith.constant 0 : index
    %66 = vector.load %arg29[%c0_12, %c0_13] : memref<8x128xf32, #tpu.memory_space<vmem>>, vector<8x128xf32>
    tpu.vector_store %arg29[%c0_12, %c0_13], %41 {strides = array<i32>} : memref<8x128xf32, #tpu.memory_space<vmem>>, vector<8x128xf32>,
    %c0_14 = arith.constant 0 : index
    %c0_15 = arith.constant 0 : index
    %67 = vector.load %arg30[%c0_14, %c0_15] : memref<16x128xf32, #tpu.memory_space<vmem>>, vector<16x128xf32>
    tpu.vector_store %arg30[%c0_14, %c0_15], %65 {strides = array<i32>} : memref<16x128xf32, #tpu.memory_space<vmem>>, vector<16x128xf32>,
    %cst_16 = arith.constant 0.000000e+00 : f32
    %68 = vector.broadcast %cst_16 : f32 to vector<8x128xf32>
    %c0_17 = arith.constant 0 : index
    %c0_18 = arith.constant 0 : index
    %69 = vector.load %arg31[%c0_17, %c0_18] : memref<8x128xf32, #tpu.memory_space<vmem>>, vector<8x128xf32>
    tpu.vector_store %arg31[%c0_17, %c0_18], %68 {strides = array<i32>} : memref<8x128xf32, #tpu.memory_space<vmem>>, vector<8x128xf32>,
    %c0_i32 = arith.constant 0 : i32
    %c16_i32 = arith.constant 16 : i32
    %70 = arith.addi %c0_i32, %c16_i32 : i32
    %c1_i32 = arith.constant 1 : i32
    scf.for %arg32 = %c0_i32 to %70 step %c1_i32  : i32 {
      %178 = arith.index_cast %arg32 : i32 to index
      %179 = memref.load %arg5[%178] : memref<16xi32, #tpu.memory_space<smem>>
      %180 = arith.index_cast %arg32 : i32 to index
      %181 = memref.load %arg6[%180] : memref<16xi32, #tpu.memory_space<smem>>
      %182 = arith.index_cast %arg32 : i32 to index
      %c0_72 = arith.constant 0 : index
      %183 = vector.load %arg30[%182, %c0_72] : memref<16x128xf32, #tpu.memory_space<vmem>>, vector<1x128xf32>
      %184 = arith.index_cast %179 : i32 to index
      %c0_73 = arith.constant 0 : index
      %185 = vector.load %arg29[%184, %c0_73] : memref<8x128xf32, #tpu.memory_space<vmem>>, vector<1x128xf32>
      %186 = arith.mulf %183, %185 : vector<1x128xf32>
      %187 = arith.index_cast %181 : i32 to index
      %c0_74 = arith.constant 0 : index
      %188 = vector.load %arg31[%187, %c0_74] : memref<8x128xf32, #tpu.memory_space<vmem>>, vector<1x128xf32>
      %189 = arith.addf %188, %186 : vector<1x128xf32>
      %190 = arith.index_cast %181 : i32 to index
      %c0_75 = arith.constant 0 : index
      %191 = vector.load %arg31[%190, %c0_75] : memref<8x128xf32, #tpu.memory_space<vmem>>, vector<1x128xf32>
      tpu.vector_store %arg31[%190, %c0_75], %189 {strides = array<i32>} : memref<8x128xf32, #tpu.memory_space<vmem>>, vector<1x128xf32>,
    }
    %c16_i32_19 = arith.constant 16 : i32
    %71 = arith.truncf %41 : vector<8x128xf32> to vector<8x128xbf16>
    %c0_20 = arith.constant 0 : index
    %c0_21 = arith.constant 0 : index
    %72 = vector.load %arg15[%c0_20, %c0_21] : memref<128x128xbf16, #tpu.memory_space<vmem>>, vector<128x128xbf16>
    %cst_22 = arith.constant dense<0.000000e+00> : vector<8x128xf32>
    %73 = tpu.matmul %71, %72, %cst_22 {dimension_numbers = #tpu.dot_dimension_numbers<[1], [0], [0], [1], [0, 0, 1, 1], [], []>} : vector<8x128xbf16>, vector<128x128xbf16>, vector<8x128xf32> -> vector<8x128xf32>
    %c0_23 = arith.constant 0 : index
    %c0_24 = arith.constant 0 : index
    %74 = vector.load %arg31[%c0_23, %c0_24] : memref<8x128xf32, #tpu.memory_space<vmem>>, vector<8x128xf32>
    %75 = arith.truncf %74 : vector<8x128xf32> to vector<8x128xbf16>
    %c0_25 = arith.constant 0 : index
    %c0_26 = arith.constant 0 : index
    %76 = vector.load %arg16[%c0_25, %c0_26] : memref<128x128xbf16, #tpu.memory_space<vmem>>, vector<128x128xbf16>
    %cst_27 = arith.constant dense<0.000000e+00> : vector<8x128xf32>
    %77 = tpu.matmul %75, %76, %cst_27 {dimension_numbers = #tpu.dot_dimension_numbers<[1], [0], [0], [1], [0, 0, 1, 1], [], []>} : vector<8x128xbf16>, vector<128x128xbf16>, vector<8x128xf32> -> vector<8x128xf32>
    %78 = arith.addf %73, %77 : vector<8x128xf32>
    %c0_28 = arith.constant 0 : index
    %c0_29 = arith.constant 0 : index
    %79 = vector.load %arg17[%c0_28, %c0_29] : memref<1x128xf32, #tpu.memory_space<vmem>>, vector<1x128xf32>
    %80 = vector.broadcast %79 : vector<1x128xf32> to vector<8x128xf32>
    %81 = arith.addf %78, %80 : vector<8x128xf32>
    %cst_30 = arith.constant 0.000000e+00 : f32
    %82 = vector.broadcast %cst_30 : f32 to vector<8x128xf32>
    %83 = arith.maximumf %81, %82 : vector<8x128xf32>
    %c0_31 = arith.constant 0 : index
    %c0_32 = arith.constant 0 : index
    %84 = vector.load %arg18[%c0_31, %c0_32] : memref<1x128xf32, #tpu.memory_space<vmem>>, vector<1x128xf32>
    %85 = vector.broadcast %84 : vector<1x128xf32> to vector<8x128xf32>
    %86 = arith.mulf %83, %85 : vector<8x128xf32>
    %cst_33 = arith.constant dense<0.000000e+00> : vector<8xf32>
    %87 = vector.multi_reduction <add>, %86, %cst_33 [1] : vector<8x128xf32> to vector<8xf32>
    %88 = vector.shape_cast %87 : vector<8xf32> to vector<8x1xf32>
    %c0_34 = arith.constant 0 : index
    %c0_35 = arith.constant 0 : index
    %89 = vector.load %arg19[%c0_34, %c0_35] : memref<1x1xf32, #tpu.memory_space<vmem>>, vector<1x1xf32>
    %90 = vector.broadcast %89 : vector<1x1xf32> to vector<8x1xf32>
    %91 = arith.addf %88, %90 : vector<8x1xf32>
    %c0_36 = arith.constant 0 : index
    %c0_37 = arith.constant 0 : index
    %92 = vector.load %arg27[%c0_36, %c0_37] : memref<8x1xf32, #tpu.memory_space<vmem>>, vector<8x1xf32>
    tpu.vector_store %arg27[%c0_36, %c0_37], %91 {strides = array<i32>} : memref<8x1xf32, #tpu.memory_space<vmem>>, vector<8x1xf32>,
    %93 = tpu.iota {dimensions = array<i32: 0>} : vector<8x8xi32>
    %c0_38 = arith.constant 0 : index
    %c0_39 = arith.constant 0 : index
    %94 = vector.load %arg7[%c0_38, %c0_39] : memref<1x8xi32, #tpu.memory_space<vmem>>, vector<1x8xi32>
    %95 = vector.broadcast %94 : vector<1x8xi32> to vector<8x8xi32>
    %96 = arith.cmpi eq, %93, %95 : vector<8x8xi32>
    %97 = arith.extui %96 : vector<8x8xi1> to vector<8x8xi32>
    %98 = arith.sitofp %97 : vector<8x8xi32> to vector<8x8xf32>
    %99 = arith.truncf %98 : vector<8x8xf32> to vector<8x8xbf16>
    %100 = arith.truncf %83 : vector<8x128xf32> to vector<8x128xbf16>
    %cst_40 = arith.constant dense<0.000000e+00> : vector<8x128xf32>
    %101 = tpu.matmul %99, %100, %cst_40 {dimension_numbers = #tpu.dot_dimension_numbers<[1], [0], [0], [1], [0, 0, 1, 1], [], []>} : vector<8x8xbf16>, vector<8x128xbf16>, vector<8x128xf32> -> vector<8x128xf32>
    %c0_41 = arith.constant 0 : index
    %c0_42 = arith.constant 0 : index
    %102 = vector.load %arg9[%c0_41, %c0_42] : memref<8x1xf32, #tpu.memory_space<vmem>>, vector<8x1xf32>
    %103 = vector.broadcast %102 : vector<8x1xf32> to vector<8x128xf32>
    %104 = arith.mulf %101, %103 : vector<8x128xf32>
    %105 = tpu.iota {dimensions = array<i32: 0>} : vector<8x16xi32>
    %c0_43 = arith.constant 0 : index
    %c0_44 = arith.constant 0 : index
    %106 = vector.load %arg8[%c0_43, %c0_44] : memref<1x16xi32, #tpu.memory_space<vmem>>, vector<1x16xi32>
    %107 = vector.broadcast %106 : vector<1x16xi32> to vector<8x16xi32>
    %108 = arith.cmpi eq, %105, %107 : vector<8x16xi32>
    %109 = arith.extui %108 : vector<8x16xi1> to vector<8x16xi32>
    %110 = arith.sitofp %109 : vector<8x16xi32> to vector<8x16xf32>
    %111 = arith.truncf %110 : vector<8x16xf32> to vector<8x16xbf16>
    %112 = arith.truncf %65 : vector<16x128xf32> to vector<16x128xbf16>
    %cst_45 = arith.constant dense<0.000000e+00> : vector<8x128xf32>
    %113 = tpu.matmul %111, %112, %cst_45 {dimension_numbers = #tpu.dot_dimension_numbers<[1], [0], [0], [1], [0, 0, 1, 1], [], []>} : vector<8x16xbf16>, vector<16x128xbf16>, vector<8x128xf32> -> vector<8x128xf32>
    %c0_46 = arith.constant 0 : index
    %c0_47 = arith.constant 0 : index
    %114 = vector.load %arg10[%c0_46, %c0_47] : memref<8x1xf32, #tpu.memory_space<vmem>>, vector<8x1xf32>
    %115 = vector.broadcast %114 : vector<8x1xf32> to vector<8x128xf32>
    %116 = arith.mulf %113, %115 : vector<8x128xf32>
    %117 = arith.truncf %104 : vector<8x128xf32> to vector<8x128xbf16>
    %c0_48 = arith.constant 0 : index
    %c0_49 = arith.constant 0 : index
    %118 = vector.load %arg20[%c0_48, %c0_49] : memref<128x128xbf16, #tpu.memory_space<vmem>>, vector<128x128xbf16>
    %cst_50 = arith.constant dense<0.000000e+00> : vector<8x128xf32>
    %119 = tpu.matmul %117, %118, %cst_50 {dimension_numbers = #tpu.dot_dimension_numbers<[1], [0], [0], [1], [0, 0, 1, 1], [], []>} : vector<8x128xbf16>, vector<128x128xbf16>, vector<8x128xf32> -> vector<8x128xf32>
    %120 = arith.truncf %116 : vector<8x128xf32> to vector<8x128xbf16>
    %c0_51 = arith.constant 0 : index
    %c0_52 = arith.constant 0 : index
    %121 = vector.load %arg21[%c0_51, %c0_52] : memref<128x128xbf16, #tpu.memory_space<vmem>>, vector<128x128xbf16>
    %cst_53 = arith.constant dense<0.000000e+00> : vector<8x128xf32>
    %122 = tpu.matmul %120, %121, %cst_53 {dimension_numbers = #tpu.dot_dimension_numbers<[1], [0], [0], [1], [0, 0, 1, 1], [], []>} : vector<8x128xbf16>, vector<128x128xbf16>, vector<8x128xf32> -> vector<8x128xf32>
    %123 = arith.addf %119, %122 : vector<8x128xf32>
    %c0_54 = arith.constant 0 : index
    %c0_55 = arith.constant 0 : index
    %124 = vector.load %arg3[%c0_54, %c0_55] : memref<8x4xf32, #tpu.memory_space<vmem>>, vector<8x4xf32>
    %c0_56 = arith.constant 0 : index
    %c0_57 = arith.constant 0 : index
    %125 = vector.load %arg22[%c0_56, %c0_57] : memref<4x128xf32, #tpu.memory_space<vmem>>, vector<4x128xf32>
    %126 = vector.extract_strided_slice %124 {offsets = [0, 0], sizes = [8, 1], strides = [1, 1]} : vector<8x4xf32> to vector<8x1xf32>
    %127 = vector.extract_strided_slice %125 {offsets = [0, 0], sizes = [1, 128], strides = [1, 1]} : vector<4x128xf32> to vector<1x128xf32>
    %128 = vector.broadcast %126 : vector<8x1xf32> to vector<8x128xf32>
    %129 = vector.broadcast %127 : vector<1x128xf32> to vector<8x128xf32>
    %130 = arith.mulf %128, %129 : vector<8x128xf32>
    %131 = vector.extract_strided_slice %124 {offsets = [0, 1], sizes = [8, 1], strides = [1, 1]} : vector<8x4xf32> to vector<8x1xf32>
    %132 = vector.extract_strided_slice %125 {offsets = [1, 0], sizes = [1, 128], strides = [1, 1]} : vector<4x128xf32> to vector<1x128xf32>
    %133 = vector.broadcast %131 : vector<8x1xf32> to vector<8x128xf32>
    %134 = vector.broadcast %132 : vector<1x128xf32> to vector<8x128xf32>
    %135 = arith.mulf %133, %134 : vector<8x128xf32>
    %136 = arith.addf %130, %135 : vector<8x128xf32>
    %137 = vector.extract_strided_slice %124 {offsets = [0, 2], sizes = [8, 1], strides = [1, 1]} : vector<8x4xf32> to vector<8x1xf32>
    %138 = vector.extract_strided_slice %125 {offsets = [2, 0], sizes = [1, 128], strides = [1, 1]} : vector<4x128xf32> to vector<1x128xf32>
    %139 = vector.broadcast %137 : vector<8x1xf32> to vector<8x128xf32>
    %140 = vector.broadcast %138 : vector<1x128xf32> to vector<8x128xf32>
    %141 = arith.mulf %139, %140 : vector<8x128xf32>
    %142 = arith.addf %136, %141 : vector<8x128xf32>
    %143 = vector.extract_strided_slice %124 {offsets = [0, 3], sizes = [8, 1], strides = [1, 1]} : vector<8x4xf32> to vector<8x1xf32>
    %144 = vector.extract_strided_slice %125 {offsets = [3, 0], sizes = [1, 128], strides = [1, 1]} : vector<4x128xf32> to vector<1x128xf32>
    %145 = vector.broadcast %143 : vector<8x1xf32> to vector<8x128xf32>
    %146 = vector.broadcast %144 : vector<1x128xf32> to vector<8x128xf32>
    %147 = arith.mulf %145, %146 : vector<8x128xf32>
    %148 = arith.addf %142, %147 : vector<8x128xf32>
    %149 = arith.addf %123, %148 : vector<8x128xf32>
    %c0_58 = arith.constant 0 : index
    %c0_59 = arith.constant 0 : index
    %150 = vector.load %arg4[%c0_58, %c0_59] : memref<8x2xf32, #tpu.memory_space<vmem>>, vector<8x2xf32>
    %c0_60 = arith.constant 0 : index
    %c0_61 = arith.constant 0 : index
    %151 = vector.load %arg23[%c0_60, %c0_61] : memref<2x128xf32, #tpu.memory_space<vmem>>, vector<2x128xf32>
    %152 = vector.extract_strided_slice %150 {offsets = [0, 0], sizes = [8, 1], strides = [1, 1]} : vector<8x2xf32> to vector<8x1xf32>
    %153 = vector.extract_strided_slice %151 {offsets = [0, 0], sizes = [1, 128], strides = [1, 1]} : vector<2x128xf32> to vector<1x128xf32>
    %154 = vector.broadcast %152 : vector<8x1xf32> to vector<8x128xf32>
    %155 = vector.broadcast %153 : vector<1x128xf32> to vector<8x128xf32>
    %156 = arith.mulf %154, %155 : vector<8x128xf32>
    %157 = vector.extract_strided_slice %150 {offsets = [0, 1], sizes = [8, 1], strides = [1, 1]} : vector<8x2xf32> to vector<8x1xf32>
    %158 = vector.extract_strided_slice %151 {offsets = [1, 0], sizes = [1, 128], strides = [1, 1]} : vector<2x128xf32> to vector<1x128xf32>
    %159 = vector.broadcast %157 : vector<8x1xf32> to vector<8x128xf32>
    %160 = vector.broadcast %158 : vector<1x128xf32> to vector<8x128xf32>
    %161 = arith.mulf %159, %160 : vector<8x128xf32>
    %162 = arith.addf %156, %161 : vector<8x128xf32>
    %163 = arith.addf %149, %162 : vector<8x128xf32>
    %c0_62 = arith.constant 0 : index
    %c0_63 = arith.constant 0 : index
    %164 = vector.load %arg24[%c0_62, %c0_63] : memref<1x128xf32, #tpu.memory_space<vmem>>, vector<1x128xf32>
    %165 = vector.broadcast %164 : vector<1x128xf32> to vector<8x128xf32>
    %166 = arith.addf %163, %165 : vector<8x128xf32>
    %cst_64 = arith.constant 0.000000e+00 : f32
    %167 = vector.broadcast %cst_64 : f32 to vector<8x128xf32>
    %168 = arith.maximumf %166, %167 : vector<8x128xf32>
    %c0_65 = arith.constant 0 : index
    %c0_66 = arith.constant 0 : index
    %169 = vector.load %arg25[%c0_65, %c0_66] : memref<1x128xf32, #tpu.memory_space<vmem>>, vector<1x128xf32>
    %170 = vector.broadcast %169 : vector<1x128xf32> to vector<8x128xf32>
    %171 = arith.mulf %168, %170 : vector<8x128xf32>
    %cst_67 = arith.constant dense<0.000000e+00> : vector<8xf32>
    %172 = vector.multi_reduction <add>, %171, %cst_67 [1] : vector<8x128xf32> to vector<8xf32>
    %173 = vector.shape_cast %172 : vector<8xf32> to vector<8x1xf32>
    %c0_68 = arith.constant 0 : index
    %c0_69 = arith.constant 0 : index
    %174 = vector.load %arg26[%c0_68, %c0_69] : memref<1x1xf32, #tpu.memory_space<vmem>>, vector<1x1xf32>
    %175 = vector.broadcast %174 : vector<1x1xf32> to vector<8x1xf32>
    %176 = arith.addf %173, %175 : vector<8x1xf32>
    %c0_70 = arith.constant 0 : index
    %c0_71 = arith.constant 0 : index
    %177 = vector.load %arg28[%c0_70, %c0_71] : memref<8x1xf32, #tpu.memory_space<vmem>>, vector<8x1xf32>
    tpu.vector_store %arg28[%c0_70, %c0_71], %176 {strides = array<i32>} : memref<8x1xf32, #tpu.memory_space<vmem>>, vector<8x1xf32>,
    return
  }
  func.func @transform_0(%arg0: i32) -> (i32, i32) {
    %c0_i32 = arith.constant 0 : i32
    %c0_i32_0 = arith.constant 0 : i32
    %c0_i32_1 = arith.constant 0 : i32
    return %c0_i32, %c0_i32_0 : i32, i32
  }
  func.func @transform_1(%arg0: i32) -> (i32, i32) {
    %c0_i32 = arith.constant 0 : i32
    %c0_i32_0 = arith.constant 0 : i32
    %c0_i32_1 = arith.constant 0 : i32
    return %c0_i32, %c0_i32_0 : i32, i32
  }
  func.func @transform_2(%arg0: i32) -> (i32, i32) {
    %c0_i32 = arith.constant 0 : i32
    %c0_i32_0 = arith.constant 0 : i32
    %c0_i32_1 = arith.constant 0 : i32
    return %c0_i32, %c0_i32_0 : i32, i32
  }
  func.func @transform_3(%arg0: i32) -> (i32, i32) {
    %c0_i32 = arith.constant 0 : i32
    %c0_i32_0 = arith.constant 0 : i32
    %c0_i32_1 = arith.constant 0 : i32
    return %c0_i32, %c0_i32_0 : i32, i32
  }
  func.func @transform_4(%arg0: i32) -> i32 {
    %c0_i32 = arith.constant 0 : i32
    %c0_i32_0 = arith.constant 0 : i32
    return %c0_i32 : i32
  }
  func.func @transform_5(%arg0: i32) -> i32 {
    %c0_i32 = arith.constant 0 : i32
    %c0_i32_0 = arith.constant 0 : i32
    return %c0_i32 : i32
  }
  func.func @transform_6(%arg0: i32) -> (i32, i32) {
    %c0_i32 = arith.constant 0 : i32
    %c0_i32_0 = arith.constant 0 : i32
    %c0_i32_1 = arith.constant 0 : i32
    return %c0_i32, %c0_i32_0 : i32, i32
  }
  func.func @transform_7(%arg0: i32) -> (i32, i32) {
    %c0_i32 = arith.constant 0 : i32
    %c0_i32_0 = arith.constant 0 : i32
    %c0_i32_1 = arith.constant 0 : i32
    return %c0_i32, %c0_i32_0 : i32, i32
  }
  func.func @transform_8(%arg0: i32) -> (i32, i32) {
    %c0_i32 = arith.constant 0 : i32
    %c0_i32_0 = arith.constant 0 : i32
    %c0_i32_1 = arith.constant 0 : i32
    return %c0_i32, %c0_i32_0 : i32, i32
  }
  func.func @transform_9(%arg0: i32) -> (i32, i32) {
    %c0_i32 = arith.constant 0 : i32
    %c0_i32_0 = arith.constant 0 : i32
    %c0_i32_1 = arith.constant 0 : i32
    return %c0_i32, %c0_i32_0 : i32, i32
  }
  func.func @transform_10(%arg0: i32) -> (i32, i32) {
    %c0_i32 = arith.constant 0 : i32
    %c0_i32_0 = arith.constant 0 : i32
    %c0_i32_1 = arith.constant 0 : i32
    return %c0_i32, %c0_i32_0 : i32, i32
  }
  func.func @transform_11(%arg0: i32) -> (i32, i32) {
    %c0_i32 = arith.constant 0 : i32
    %c0_i32_0 = arith.constant 0 : i32
    %c0_i32_1 = arith.constant 0 : i32
    return %c0_i32, %c0_i32_0 : i32, i32
  }
  func.func @transform_12(%arg0: i32) -> (i32, i32) {
    %c0_i32 = arith.constant 0 : i32
    %c0_i32_0 = arith.constant 0 : i32
    %c0_i32_1 = arith.constant 0 : i32
    return %c0_i32, %c0_i32_0 : i32, i32
  }
  func.func @transform_13(%arg0: i32) -> (i32, i32) {
    %c0_i32 = arith.constant 0 : i32
    %c0_i32_0 = arith.constant 0 : i32
    %c0_i32_1 = arith.constant 0 : i32
    return %c0_i32, %c0_i32_0 : i32, i32
  }
  func.func @transform_14(%arg0: i32) -> (i32, i32) {
    %c0_i32 = arith.constant 0 : i32
    %c0_i32_0 = arith.constant 0 : i32
    %c0_i32_1 = arith.constant 0 : i32
    return %c0_i32, %c0_i32_0 : i32, i32
  }
  func.func @transform_15(%arg0: i32) -> (i32, i32) {
    %c0_i32 = arith.constant 0 : i32
    %c0_i32_0 = arith.constant 0 : i32
    %c0_i32_1 = arith.constant 0 : i32
    return %c0_i32, %c0_i32_0 : i32, i32
  }
  func.func @transform_16(%arg0: i32) -> (i32, i32) {
    %c0_i32 = arith.constant 0 : i32
    %c0_i32_0 = arith.constant 0 : i32
    %c0_i32_1 = arith.constant 0 : i32
    return %c0_i32, %c0_i32_0 : i32, i32
  }
  func.func @transform_17(%arg0: i32) -> (i32, i32) {
    %c0_i32 = arith.constant 0 : i32
    %c0_i32_0 = arith.constant 0 : i32
    %c0_i32_1 = arith.constant 0 : i32
    return %c0_i32, %c0_i32_0 : i32, i32
  }
  func.func @transform_18(%arg0: i32) -> (i32, i32) {
    %c0_i32 = arith.constant 0 : i32
    %c0_i32_0 = arith.constant 0 : i32
    %c0_i32_1 = arith.constant 0 : i32
    return %c0_i32, %c0_i32_0 : i32, i32
  }
  func.func @transform_19(%arg0: i32) -> (i32, i32) {
    %c0_i32 = arith.constant 0 : i32
    %c0_i32_0 = arith.constant 0 : i32
    %c0_i32_1 = arith.constant 0 : i32
    return %c0_i32, %c0_i32_0 : i32, i32
  }
  func.func @transform_20(%arg0: i32) -> (i32, i32) {
    %c0_i32 = arith.constant 0 : i32
    %c0_i32_0 = arith.constant 0 : i32
    %c0_i32_1 = arith.constant 0 : i32
    return %c0_i32, %c0_i32_0 : i32, i32
  }
  func.func @transform_21(%arg0: i32) -> (i32, i32) {
    %c0_i32 = arith.constant 0 : i32
    %c0_i32_0 = arith.constant 0 : i32
    %c0_i32_1 = arith.constant 0 : i32
    return %c0_i32, %c0_i32_0 : i32, i32
  }
  func.func @transform_22(%arg0: i32) -> (i32, i32) {
    %c0_i32 = arith.constant 0 : i32
    %c0_i32_0 = arith.constant 0 : i32
    %c0_i32_1 = arith.constant 0 : i32
    return %c0_i32, %c0_i32_0 : i32, i32
  }
  func.func @transform_23(%arg0: i32) -> (i32, i32) {
    %c0_i32 = arith.constant 0 : i32
    %c0_i32_0 = arith.constant 0 : i32
    %c0_i32_1 = arith.constant 0 : i32
    return %c0_i32, %c0_i32_0 : i32, i32
  }
  func.func @transform_24(%arg0: i32) -> (i32, i32) {
    %c0_i32 = arith.constant 0 : i32
    %c0_i32_0 = arith.constant 0 : i32
    %c0_i32_1 = arith.constant 0 : i32
    return %c0_i32, %c0_i32_0 : i32, i32
  }
  func.func @transform_25(%arg0: i32) -> (i32, i32) {
    %c0_i32 = arith.constant 0 : i32
    %c0_i32_0 = arith.constant 0 : i32
    %c0_i32_1 = arith.constant 0 : i32
    return %c0_i32, %c0_i32_0 : i32, i32
  }
  func.func @transform_26(%arg0: i32) -> (i32, i32) {
    %c0_i32 = arith.constant 0 : i32
    %c0_i32_0 = arith.constant 0 : i32
    %c0_i32_1 = arith.constant 0 : i32
    return %c0_i32, %c0_i32_0 : i32, i32
  }
  func.func @transform_27(%arg0: i32) -> (i32, i32) {
    %c0_i32 = arith.constant 0 : i32
    %c0_i32_0 = arith.constant 0 : i32
    %c0_i32_1 = arith.constant 0 : i32
    return %c0_i32, %c0_i32_0 : i32, i32
  }
}

</mosaic_0001>

<llo_original>
// kernel: fused_forward.1
$region0: #{fused_forward.1}
  #allocation0 [shape = 'u32[]', space=smem, size = 0x4, offset = 0x4, fixed_abs, tag = 'smem constant byte address 0x4 - core index']
  #allocation1 [shape = 'u32[144,128]{1,0:T(1,128)}', space=vmem, size = 0x12000, scoped, tag = 'internal scratch']
  #allocation2 [shape = 'f32[8,128]{1,0:T(8,128)}', space=vmem, size = 0x1000, scoped, tag = 'scratch operand']
  #allocation3 [shape = 'f32[16,128]{1,0:T(8,128)}', space=vmem, size = 0x2000, scoped, tag = 'scratch operand']
  #allocation4 [shape = 'f32[8,128]{1,0:T(8,128)}', space=vmem, size = 0x1000, scoped, tag = 'scratch operand']
  #allocation5 [shape = 'f32[1,1]{1,0:T(1,128)S(1)}', space=vmem, size = 0x200, scoped, tag = 'scoped memory for fused_forward.1']
  #allocation6 [shape = 'f32[1,1]{1,0:T(1,128)S(1)}', space=vmem, size = 0x200, scoped, tag = 'scoped memory for fused_forward.1']
  %s0 = inlined_call_operand.vmem [shape: f32[8,6], index: 0, kind: input, shape index: {}]
  %s1 = inlined_call_operand.vmem [shape: f32[16,3], index: 1, kind: input, shape index: {}]
  %s2 = inlined_call_operand.vmem [shape: f32[8,4], index: 2, kind: input, shape index: {}]
  %s3 = inlined_call_operand.vmem [shape: f32[8,2], index: 3, kind: input, shape index: {}]
  %s4 = inlined_call_operand.vmem [shape: s32[16], index: 4, kind: input, shape index: {}]
  %s5 = inlined_call_operand.vmem [shape: s32[16], index: 5, kind: input, shape index: {}]
  %s6 = inlined_call_operand.vmem [shape: s32[1,8], index: 6, kind: input, shape index: {}]
  %s7 = inlined_call_operand.vmem [shape: s32[1,16], index: 7, kind: input, shape index: {}]
  %s8 = inlined_call_operand.vmem [shape: f32[8,1], index: 8, kind: input, shape index: {}]
  %s9 = inlined_call_operand.vmem [shape: f32[8,1], index: 9, kind: input, shape index: {}]
  %s10 = inlined_call_operand.vmem [shape: f32[6,128], index: 10, kind: input, shape index: {}]
  %s11 = inlined_call_operand.vmem [shape: f32[1,128], index: 11, kind: input, shape index: {}]
  %s12 = inlined_call_operand.vmem [shape: f32[3,128], index: 12, kind: input, shape index: {}]
  %s13 = inlined_call_operand.vmem [shape: f32[1,128], index: 13, kind: input, shape index: {}]
  %s14 = inlined_call_operand.vmem [shape: bf16[128,128], index: 14, kind: input, shape index: {}]
  %s15 = inlined_call_operand.vmem [shape: bf16[128,128], index: 15, kind: input, shape index: {}]
  %s16 = inlined_call_operand.vmem [shape: f32[1,128], index: 16, kind: input, shape index: {}]
  %s17 = inlined_call_operand.vmem [shape: f32[1,128], index: 17, kind: input, shape index: {}]
  %s18 = inlined_call_operand.<no memory space> [shape: f32[1,1], index: 18, kind: input, shape index: {}]
  %s19 = inlined_call_operand.vmem [shape: bf16[128,128], index: 19, kind: input, shape index: {}]
  %s20 = inlined_call_operand.vmem [shape: bf16[128,128], index: 20, kind: input, shape index: {}]
  %s21 = inlined_call_operand.vmem [shape: f32[4,128], index: 21, kind: input, shape index: {}]
  %s22 = inlined_call_operand.vmem [shape: f32[2,128], index: 22, kind: input, shape index: {}]
  %s23 = inlined_call_operand.vmem [shape: f32[1,128], index: 23, kind: input, shape index: {}]
  %s24 = inlined_call_operand.vmem [shape: f32[1,128], index: 24, kind: input, shape index: {}]
  %s25 = inlined_call_operand.<no memory space> [shape: f32[1,1], index: 25, kind: input, shape index: {}]
  %s26 = inlined_call_operand.vmem [shape: f32[8,1], index: 26, kind: output, shape index: {0}]
  %s27 = inlined_call_operand.vmem [shape: f32[8,1], index: 27, kind: output, shape index: {1}]
  %28 = xla_tuple %s26, %s27
  %s29 = sld [smem:[#allocation0]]
  $region137: #{fused_forward.1} parent=0
    _
  %s31 = ssub.s32 1, %s29
  %s32 = scalar_select 0, %s31, %s29
  %v33 = vstv %s18
  %34 = vst [vmem:[#allocation5] sm:$0x1] %v33
  %v35 = vstv %s25
  %36 = vst [vmem:[#allocation6] sm:$0x1] %v35
  $region1: #{fused_forward.1} parent=0
    #allocation7 [shape = 'u8[512]{0}', space=smem, size = 0x200, scoped, tag = 'input window, operand 4, single buffered']
    #allocation8 [shape = 's32[1]{0}', space=sflag, size = 0x4, scoped, tag = 'scoped memory for fused_forward.1']
    #allocation9 [shape = 'u8[512]{0}', space=smem, size = 0x200, scoped, tag = 'input window, operand 5, single buffered']
    #allocation10 [shape = 's32[1]{0}', space=sflag, size = 0x4, scoped, tag = 'scoped memory for fused_forward.1']
    %37 = vsyncpa [#allocation8], 0
    %38 = vsyncpa [#allocation10], 0
    // Predicated region
    $region2: #{fused_forward.1} parent=1 // pred_check
      _
    $region3: #{fused_forward.1} parent=1 // pred_check_branch
      %40 = sbr.rel (0) target = $region5
    $region4: #{fused_forward.1} parent=1 // pred_region
      _
    $region5: #{fused_forward.1} parent=1 // pred_fallthru
      _
    // Predicated region
    $region6: #{fused_forward.1} parent=1 // pred_check
      _
    $region7: #{fused_forward.1} parent=1 // pred_check_branch
      %42 = sbr.rel (0) target = $region9
    $region8: #{fused_forward.1} parent=1 // pred_region
      _
    $region9: #{fused_forward.1} parent=1 // pred_fallthru
      _
    // Predicated region
    $region10: #{fused_forward.1} parent=1 // pred_check
      _
    $region11: #{fused_forward.1} parent=1 // pred_check_branch
      %44 = sbr.rel (0) target = $region13
    $region12: #{fused_forward.1} parent=1 // pred_region
      _
    $region13: #{fused_forward.1} parent=1 // pred_fallthru
      _
    // Predicated region
    $region14: #{fused_forward.1} parent=1 // pred_check
      _
    $region15: #{fused_forward.1} parent=1 // pred_check_branch
      %46 = sbr.rel (0) target = $region17
    $region16: #{fused_forward.1} parent=1 // pred_region
      _
    $region17: #{fused_forward.1} parent=1 // pred_fallthru
      _
    // Predicated region
    $region18: #{fused_forward.1} parent=1 // pred_check
      _
    $region19: #{fused_forward.1} parent=1 // pred_check_branch
      %48 = sbr.rel (0) target = $region21
    $region20: #{fused_forward.1} parent=1 // pred_region
      %s50 = ssub.s32 16, 16
      %51 = vsyncadd [#allocation8], %s50
      %s53 = sshll.u32 %s4, 4
      %s54 = int_to_ptr.vmem [resolvable:$true] %s53
      %56 = dma.vmem_to_smem %s54, 16, [#allocation7], [#allocation8]
    $region21: #{fused_forward.1} parent=1 // pred_fallthru
      _
    // Predicated region
    $region22: #{fused_forward.1} parent=1 // pred_check
      _
    $region23: #{fused_forward.1} parent=1 // pred_check_branch
      %58 = sbr.rel (0) target = $region25
    $region24: #{fused_forward.1} parent=1 // pred_region
      %s60 = ssub.s32 16, 16
      %61 = vsyncadd [#allocation10], %s60
      %s63 = sshll.u32 %s5, 4
      %s64 = int_to_ptr.vmem [resolvable:$true] %s63
      %66 = dma.vmem_to_smem %s64, 16, [#allocation9], [#allocation10]
    $region25: #{fused_forward.1} parent=1 // pred_fallthru
      _
    // Predicated region
    $region26: #{fused_forward.1} parent=1 // pred_check
      _
    $region27: #{fused_forward.1} parent=1 // pred_check_branch
      %68 = sbr.rel (0) target = $region29
    $region28: #{fused_forward.1} parent=1 // pred_region
      _
    $region29: #{fused_forward.1} parent=1 // pred_fallthru
      _
    // Predicated region
    $region30: #{fused_forward.1} parent=1 // pred_check
      _
    $region31: #{fused_forward.1} parent=1 // pred_check_branch
      %70 = sbr.rel (0) target = $region33
    $region32: #{fused_forward.1} parent=1 // pred_region
      _
    $region33: #{fused_forward.1} parent=1 // pred_fallthru
      _
    // Predicated region
    $region34: #{fused_forward.1} parent=1 // pred_check
      _
    $region35: #{fused_forward.1} parent=1 // pred_check_branch
      %72 = sbr.rel (0) target = $region37
    $region36: #{fused_forward.1} parent=1 // pred_region
      _
    $region37: #{fused_forward.1} parent=1 // pred_fallthru
      _
    // Predicated region
    $region38: #{fused_forward.1} parent=1 // pred_check
      _
    $region39: #{fused_forward.1} parent=1 // pred_check_branch
      %74 = sbr.rel (0) target = $region41
    $region40: #{fused_forward.1} parent=1 // pred_region
      _
    $region41: #{fused_forward.1} parent=1 // pred_fallthru
      _
    // Predicated region
    $region42: #{fused_forward.1} parent=1 // pred_check
      _
    $region43: #{fused_forward.1} parent=1 // pred_check_branch
      %76 = sbr.rel (0) target = $region45
    $region44: #{fused_forward.1} parent=1 // pred_region
      _
    $region45: #{fused_forward.1} parent=1 // pred_fallthru
      _
    // Predicated region
    $region46: #{fused_forward.1} parent=1 // pred_check
      _
    $region47: #{fused_forward.1} parent=1 // pred_check_branch
      %78 = sbr.rel (0) target = $region49
    $region48: #{fused_forward.1} parent=1 // pred_region
      _
    $region49: #{fused_forward.1} parent=1 // pred_fallthru
      _
    // Predicated region
    $region50: #{fused_forward.1} parent=1 // pred_check
      _
    $region51: #{fused_forward.1} parent=1 // pred_check_branch
      %80 = sbr.rel (0) target = $region53
    $region52: #{fused_forward.1} parent=1 // pred_region
      _
    $region53: #{fused_forward.1} parent=1 // pred_fallthru
      _
    // Predicated region
    $region54: #{fused_forward.1} parent=1 // pred_check
      _
    $region55: #{fused_forward.1} parent=1 // pred_check_branch
      %82 = sbr.rel (0) target = $region57
    $region56: #{fused_forward.1} parent=1 // pred_region
      _
    $region57: #{fused_forward.1} parent=1 // pred_fallthru
      _
    // Predicated region
    $region58: #{fused_forward.1} parent=1 // pred_check
      _
    $region59: #{fused_forward.1} parent=1 // pred_check_branch
      %84 = sbr.rel (0) target = $region61
    $region60: #{fused_forward.1} parent=1 // pred_region
      _
    $region61: #{fused_forward.1} parent=1 // pred_fallthru
      _
    // Predicated region
    $region62: #{fused_forward.1} parent=1 // pred_check
      _
    $region63: #{fused_forward.1} parent=1 // pred_check_branch
      %86 = sbr.rel (0) target = $region65
    $region64: #{fused_forward.1} parent=1 // pred_region
      _
    $region65: #{fused_forward.1} parent=1 // pred_fallthru
      _
    // Predicated region
    $region66: #{fused_forward.1} parent=1 // pred_check
      _
    $region67: #{fused_forward.1} parent=1 // pred_check_branch
      %88 = sbr.rel (0) target = $region69
    $region68: #{fused_forward.1} parent=1 // pred_region
      _
    $region69: #{fused_forward.1} parent=1 // pred_fallthru
      _
    // Predicated region
    $region70: #{fused_forward.1} parent=1 // pred_check
      _
    $region71: #{fused_forward.1} parent=1 // pred_check_branch
      %90 = sbr.rel (0) target = $region73
    $region72: #{fused_forward.1} parent=1 // pred_region
      _
    $region73: #{fused_forward.1} parent=1 // pred_fallthru
      _
    // Predicated region
    $region74: #{fused_forward.1} parent=1 // pred_check
      _
    $region75: #{fused_forward.1} parent=1 // pred_check_branch
      %92 = sbr.rel (0) target = $region77
    $region76: #{fused_forward.1} parent=1 // pred_region
      _
    $region77: #{fused_forward.1} parent=1 // pred_fallthru
      _
    // Predicated region
    $region78: #{fused_forward.1} parent=1 // pred_check
      _
    $region79: #{fused_forward.1} parent=1 // pred_check_branch
      %94 = sbr.rel (0) target = $region81
    $region80: #{fused_forward.1} parent=1 // pred_region
      _
    $region81: #{fused_forward.1} parent=1 // pred_fallthru
      _
    // Predicated region
    $region82: #{fused_forward.1} parent=1 // pred_check
      _
    $region83: #{fused_forward.1} parent=1 // pred_check_branch
      %96 = sbr.rel (0) target = $region85
    $region84: #{fused_forward.1} parent=1 // pred_region
      _
    $region85: #{fused_forward.1} parent=1 // pred_fallthru
      _
    // Predicated region
    $region86: #{fused_forward.1} parent=1 // pred_check
      _
    $region87: #{fused_forward.1} parent=1 // pred_check_branch
      %98 = sbr.rel (0) target = $region89
    $region88: #{fused_forward.1} parent=1 // pred_region
      _
    $region89: #{fused_forward.1} parent=1 // pred_fallthru
      _
    // Predicated region
    $region90: #{fused_forward.1} parent=1 // pred_check
      _
    $region91: #{fused_forward.1} parent=1 // pred_check_branch
      %100 = sbr.rel (0) target = $region93
    $region92: #{fused_forward.1} parent=1 // pred_region
      _
    $region93: #{fused_forward.1} parent=1 // pred_fallthru
      _
    // Predicated region
    $region94: #{fused_forward.1} parent=1 // pred_check
      _
    $region95: #{fused_forward.1} parent=1 // pred_check_branch
      %102 = sbr.rel (0) target = $region97
    $region96: #{fused_forward.1} parent=1 // pred_region
      _
    $region97: #{fused_forward.1} parent=1 // pred_fallthru
      _
    // Predicated region
    $region98: #{fused_forward.1} parent=1 // pred_check
      _
    $region99: #{fused_forward.1} parent=1 // pred_check_branch
      %104 = sbr.rel (0) target = $region101
    $region100: #{fused_forward.1} parent=1 // pred_region
      _
    $region101: #{fused_forward.1} parent=1 // pred_fallthru
      _
    // Predicated region
    $region102: #{fused_forward.1} parent=1 // pred_check
      _
    $region103: #{fused_forward.1} parent=1 // pred_check_branch
      %106 = sbr.rel (0) target = $region105
    $region104: #{fused_forward.1} parent=1 // pred_region
      _
    $region105: #{fused_forward.1} parent=1 // pred_fallthru
      _
    // Predicated region
    $region106: #{fused_forward.1} parent=1 // pred_check
      _
    $region107: #{fused_forward.1} parent=1 // pred_check_branch
      %108 = sbr.rel (0) target = $region109
    $region108: #{fused_forward.1} parent=1 // pred_region
      %109 = dma.done [#allocation8], 16
    $region109: #{fused_forward.1} parent=1 // pred_fallthru
      _
    // Predicated region
    $region110: #{fused_forward.1} parent=1 // pred_check
      _
    $region111: #{fused_forward.1} parent=1 // pred_check_branch
      %111 = sbr.rel (0) target = $region113
    $region112: #{fused_forward.1} parent=1 // pred_region
      %112 = dma.done [#allocation10], 16
    $region113: #{fused_forward.1} parent=1 // pred_fallthru
      _
    %113 = sfence
    %v115 = vld [vmem:[%s0] sm:$0xff]
    %v116 = vld [vmem:[%s10] sm:$0x3f]
    %118 = vset.pattern.permute.xlu0 0
    %119 = vperm.xlu0 %118, %v115
    %v120 = vpop.permute.xlu0 %119
    %v122 = vlaneseq
    %v123 = vshrl.u32 %v122, 7
    %v124 = vsub.s32 0, %v123
    %v125 = vrot.slane %v116, %v124
    %v126 = vmul.f32 %v120, %v125
    %127 = vset.pattern.permute.xlu0 1
    %128 = vperm.xlu0 %127, %v115
    %v129 = vpop.permute.xlu0 %128
    %v131 = vlaneseq
    %v132 = vshrl.u32 %v131, 7
    %v133 = vsub.s32 1, %v132
    %v134 = vrot.slane %v116, %v133
    %v135 = vmul.f32 %v129, %v134
    %v136 = vadd.f32 %v126, %v135
    %137 = vset.pattern.permute.xlu0 2
    %138 = vperm.xlu0 %137, %v115
    %v139 = vpop.permute.xlu0 %138
    %v141 = vlaneseq
    %v142 = vshrl.u32 %v141, 7
    %v143 = vsub.s32 2, %v142
    %v144 = vrot.slane %v116, %v143
    %v145 = vmul.f32 %v139, %v144
    %v146 = vadd.f32 %v136, %v145
    %147 = vset.pattern.permute.xlu0 3
    %148 = vperm.xlu0 %147, %v115
    %v149 = vpop.permute.xlu0 %148
    %v151 = vlaneseq
    %v152 = vshrl.u32 %v151, 7
    %v153 = vsub.s32 3, %v152
    %v154 = vrot.slane %v116, %v153
    %v155 = vmul.f32 %v149, %v154
    %v156 = vadd.f32 %v146, %v155
    %157 = vset.pattern.permute.xlu0 4
    %158 = vperm.xlu0 %157, %v115
    %v159 = vpop.permute.xlu0 %158
    %v161 = vlaneseq
    %v162 = vshrl.u32 %v161, 7
    %v163 = vsub.s32 4, %v162
    %v164 = vrot.slane %v116, %v163
    %v165 = vmul.f32 %v159, %v164
    %v166 = vadd.f32 %v156, %v165
    %167 = vset.pattern.permute.xlu0 5
    %168 = vperm.xlu0 %167, %v115
    %v169 = vpop.permute.xlu0 %168
    %v171 = vlaneseq
    %v172 = vshrl.u32 %v171, 7
    %v173 = vsub.s32 5, %v172
    %v174 = vrot.slane %v116, %v173
    %v175 = vmul.f32 %v169, %v174
    %v176 = vadd.f32 %v166, %v175
    %v177 = vld [vmem:[%s11] sm:$0x1]
    %v179 = vlaneseq
    %v180 = vshrl.u32 %v179, 7
    %v181 = vsub.s32 0, %v180
    %v182 = vrot.slane %v177, %v181
    %v184 = vadd.f32 %v176, %v182
    %v185 = vmax.f32 %v184, 0.0
    %v186 = vld [vmem:[%s1] sm:$0xff]
    %v187 = vld [vmem:[%s1 + $0x8] sm:$0xff]
    %v188 = vld [vmem:[%s12] sm:$0x7]
    %190 = vset.pattern.permute.xlu0 0
    %191 = vperm.xlu0 %190, %v186
    %v192 = vpop.permute.xlu0 %191
    %195 = vset.pattern.permute.xlu0 0
    %196 = vperm.xlu0 %195, %v187
    %v197 = vpop.permute.xlu0 %196
    %v199 = vlaneseq
    %v200 = vshrl.u32 %v199, 7
    %v201 = vsub.s32 0, %v200
    %v202 = vrot.slane %v188, %v201
    %v203 = vmul.f32 %v192, %v202
    %v204 = vmul.f32 %v197, %v202
    %205 = vset.pattern.permute.xlu0 1
    %206 = vperm.xlu0 %205, %v186
    %v207 = vpop.permute.xlu0 %206
    %209 = vset.pattern.permute.xlu0 1
    %210 = vperm.xlu0 %209, %v187
    %v211 = vpop.permute.xlu0 %210
    %v213 = vlaneseq
    %v214 = vshrl.u32 %v213, 7
    %v215 = vsub.s32 1, %v214
    %v216 = vrot.slane %v188, %v215
    %v217 = vmul.f32 %v207, %v216
    %v218 = vmul.f32 %v211, %v216
    %v219 = vadd.f32 %v203, %v217
    %v220 = vadd.f32 %v204, %v218
    %221 = vset.pattern.permute.xlu0 2
    %222 = vperm.xlu0 %221, %v186
    %v223 = vpop.permute.xlu0 %222
    %225 = vset.pattern.permute.xlu0 2
    %226 = vperm.xlu0 %225, %v187
    %v227 = vpop.permute.xlu0 %226
    %v229 = vlaneseq
    %v230 = vshrl.u32 %v229, 7
    %v231 = vsub.s32 2, %v230
    %v232 = vrot.slane %v188, %v231
    %v233 = vmul.f32 %v223, %v232
    %v234 = vmul.f32 %v227, %v232
    %v235 = vadd.f32 %v219, %v233
    %v236 = vadd.f32 %v220, %v234
    %v237 = vld [vmem:[%s13] sm:$0x1]
    %v239 = vlaneseq
    %v240 = vshrl.u32 %v239, 7
    %v241 = vsub.s32 0, %v240
    %v242 = vrot.slane %v237, %v241
    %v244 = vadd.f32 %v235, %v242
    %v245 = vadd.f32 %v236, %v242
    %v246 = vmax.f32 %v244, 0.0
    %v247 = vmax.f32 %v245, 0.0
    %248 = vst [vmem:[#allocation2] sm:$0xff] %v185
    %249 = vst [vmem:[#allocation3] sm:$0xff] %v246
    %250 = vst [vmem:[#allocation3 + $0x8] sm:$0xff] %v247
    %251 = vst [vmem:[#allocation4] sm:$0xff] 0.0
    loop: start=0, step=1, limit=16
    $region114: #{fused_forward.1} parent=1 // loop_pre_header
      _
    $region115: #{fused_forward.1} parent=1 // loop_header
      %s253 = sphi 0, %s257
      %p254 = scmp.ge.s32.totalorder %s253, 16
    $region116: #{fused_forward.1} parent=1 // loop_header_branch
      %256 = sbr.rel (%p254) target = $region120
    $region117: #{fused_forward.1} parent=1 // loop_body
      %s258 = sld [smem:[#allocation7 + %s253]]
      %s259 = sld [smem:[#allocation9 + %s253]]
      %s260 = scalar_lea.vmem [#allocation3], %s253
      %v261 = vld [vmem:[%s260] sm:$0x1]
      %s262 = scalar_lea.vmem [#allocation2], %s258
      %v263 = vld [vmem:[%s262] sm:$0x1]
      %v264 = vmul.f32 %v261, %v263
      %s265 = scalar_lea.vmem [#allocation4], %s259
      %v266 = vld [vmem:[%s265] sm:$0x1]
      %v267 = vadd.f32 %v266, %v264
      %268 = vst [vmem:[%s265] sm:$0x1] %v267
    $region118: #{fused_forward.1} parent=1 // loop_footer
      %s257 = sadd.s32 1, %s253
    $region119: #{fused_forward.1} parent=1 // loop_footer_branch
      %252 = sbr.rel target = $region115
    $region120: #{fused_forward.1} parent=1 // loop_exit
      _
    %v269 = vpack.c.bf16 %v185, %v185
    %v270 = vld [vmem:[%s14] sm:$0xf]
    %v271 = vld [vmem:[%s14 + $0x4] sm:$0xf]
    %v272 = vld [vmem:[%s14 + $0x8] sm:$0xf]
    %v273 = vld [vmem:[%s14 + $0xc] sm:$0xf]
    %v274 = vld [vmem:[%s14 + $0x10] sm:$0xf]
    %v275 = vld [vmem:[%s14 + $0x14] sm:$0xf]
    %v276 = vld [vmem:[%s14 + $0x18] sm:$0xf]
    %v277 = vld [vmem:[%s14 + $0x1c] sm:$0xf]
    %v278 = vld [vmem:[%s14 + $0x20] sm:$0xf]
    %v279 = vld [vmem:[%s14 + $0x24] sm:$0xf]
    %v280 = vld [vmem:[%s14 + $0x28] sm:$0xf]
    %v281 = vld [vmem:[%s14 + $0x2c] sm:$0xf]
    %v282 = vld [vmem:[%s14 + $0x30] sm:$0xf]
    %v283 = vld [vmem:[%s14 + $0x34] sm:$0xf]
    %v284 = vld [vmem:[%s14 + $0x38] sm:$0xf]
    %v285 = vld [vmem:[%s14 + $0x3c] sm:$0xf]
    %v286 = vld [vmem:[#allocation4] sm:$0xff]
    %v287 = vpack.c.bf16 %v286, %v286
    %v288 = vld [vmem:[%s15] sm:$0xf]
    %v289 = vld [vmem:[%s15 + $0x4] sm:$0xf]
    %v290 = vld [vmem:[%s15 + $0x8] sm:$0xf]
    %v291 = vld [vmem:[%s15 + $0xc] sm:$0xf]
    %v292 = vld [vmem:[%s15 + $0x10] sm:$0xf]
    %v293 = vld [vmem:[%s15 + $0x14] sm:$0xf]
    %v294 = vld [vmem:[%s15 + $0x18] sm:$0xf]
    %v295 = vld [vmem:[%s15 + $0x1c] sm:$0xf]
    %v296 = vld [vmem:[%s15 + $0x20] sm:$0xf]
    %v297 = vld [vmem:[%s15 + $0x24] sm:$0xf]
    %v298 = vld [vmem:[%s15 + $0x28] sm:$0xf]
    %v299 = vld [vmem:[%s15 + $0x2c] sm:$0xf]
    %v300 = vld [vmem:[%s15 + $0x30] sm:$0xf]
    %v301 = vld [vmem:[%s15 + $0x34] sm:$0xf]
    %v302 = vld [vmem:[%s15 + $0x38] sm:$0xf]
    %v303 = vld [vmem:[%s15 + $0x3c] sm:$0xf]
    %v320 = vunpack.c.l.b16 %v288
    %v321 = vunpack.c.l.b16 %v289
    %v322 = vunpack.c.l.b16 %v290
    %v323 = vunpack.c.l.b16 %v291
    %v324 = vunpack.c.l.b16 %v292
    %v325 = vunpack.c.l.b16 %v293
    %v326 = vunpack.c.l.b16 %v294
    %v327 = vunpack.c.l.b16 %v295
    %v328 = vunpack.c.l.b16 %v296
    %v329 = vunpack.c.l.b16 %v297
    %v330 = vunpack.c.l.b16 %v298
    %v331 = vunpack.c.l.b16 %v299
    %v332 = vunpack.c.l.b16 %v300
    %v333 = vunpack.c.l.b16 %v301
    %v334 = vunpack.c.l.b16 %v302
    %v335 = vunpack.c.l.b16 %v303
    %v336 = vpack.c.b16 %v321, %v320
    %v337 = vpack.c.b16 %v323, %v322
    %v338 = vpack.c.b16 %v325, %v324
    %v339 = vpack.c.b16 %v327, %v326
    %v340 = vpack.c.b16 %v329, %v328
    %v341 = vpack.c.b16 %v331, %v330
    %v342 = vpack.c.b16 %v333, %v332
    %v343 = vpack.c.b16 %v335, %v334
    %352 = vmatprep.subr.bf16.mxu0 0
    %353 = vmatpush1.bf16.msra.mxu0 %v336
    %354 = vmatprep.subr.bf16.mxu0 0
    %355 = vmatpush1.bf16.msra.mxu0 %v337
    %356 = vmatprep.subr.bf16.mxu0 0
    %357 = vmatpush1.bf16.msra.mxu0 %v338
    %358 = vmatprep.subr.bf16.mxu0 0
    %359 = vmatpush1.bf16.msra.mxu0 %v339
    %360 = vmatprep.subr.bf16.mxu0 0
    %361 = vmatpush1.bf16.msra.mxu0 %v340
    %362 = vmatprep.subr.bf16.mxu0 0
    %363 = vmatpush1.bf16.msra.mxu0 %v341
    %364 = vmatprep.subr.bf16.mxu0 0
    %365 = vmatpush1.bf16.msra.mxu0 %v342
    %366 = vmatprep.subr.bf16.mxu0 0
    %367 = vmatpush1.bf16.msra.mxu0 %v343
    %368 = vmatprep.subr.bf16.mxu0 0
    %369 = vmatpush1.bf16.msra.mxu0 0
    %370 = vmatprep.subr.bf16.mxu0 0
    %371 = vmatpush1.bf16.msra.mxu0 0
    %372 = vmatprep.subr.bf16.mxu0 0
    %373 = vmatpush1.bf16.msra.mxu0 0
    %374 = vmatprep.subr.bf16.mxu0 0
    %375 = vmatpush1.bf16.msra.mxu0 0
    %376 = vmatprep.subr.bf16.mxu0 0
    %377 = vmatpush1.bf16.msra.mxu0 0
    %378 = vmatprep.subr.bf16.mxu0 0
    %379 = vmatpush1.bf16.msra.mxu0 0
    %380 = vmatprep.subr.bf16.mxu0 0
    %381 = vmatpush1.bf16.msra.mxu0 0
    %382 = vmatprep.subr.bf16.mxu0 0
    %383 = vmatpush1.bf16.msra.mxu0 0
    %384 = vmatprep.mubr.bf16.mxu0 0
    %385 = vmatmul.mubr.bf16.gmra.mrb[0].mxu0 %v287
    %v386 = vpop.f32.mrb[0].mxu0
    %v387 = vadd.f32 0.0, %v386
    %v388 = vpop.f32.mrb[0].mxu0
    %v389 = vpop.f32.mrb[0].mxu0
    %v390 = vpop.f32.mrb[0].mxu0
    %391 = vdwg.mxu0
    %v408 = vunpack.c.l.b16 %v270
    %v409 = vunpack.c.l.b16 %v271
    %v410 = vunpack.c.l.b16 %v272
    %v411 = vunpack.c.l.b16 %v273
    %v412 = vunpack.c.l.b16 %v274
    %v413 = vunpack.c.l.b16 %v275
    %v414 = vunpack.c.l.b16 %v276
    %v415 = vunpack.c.l.b16 %v277
    %v416 = vunpack.c.l.b16 %v278
    %v417 = vunpack.c.l.b16 %v279
    %v418 = vunpack.c.l.b16 %v280
    %v419 = vunpack.c.l.b16 %v281
    %v420 = vunpack.c.l.b16 %v282
    %v421 = vunpack.c.l.b16 %v283
    %v422 = vunpack.c.l.b16 %v284
    %v423 = vunpack.c.l.b16 %v285
    %v424 = vpack.c.b16 %v409, %v408
    %v425 = vpack.c.b16 %v411, %v410
    %v426 = vpack.c.b16 %v413, %v412
    %v427 = vpack.c.b16 %v415, %v414
    %v428 = vpack.c.b16 %v417, %v416
    %v429 = vpack.c.b16 %v419, %v418
    %v430 = vpack.c.b16 %v421, %v420
    %v431 = vpack.c.b16 %v423, %v422
    %440 = vmatprep.subr.bf16.mxu0 0
    %441 = vmatpush1.bf16.msra.mxu0 %v424
    %442 = vmatprep.subr.bf16.mxu0 0
    %443 = vmatpush1.bf16.msra.mxu0 %v425
    %444 = vmatprep.subr.bf16.mxu0 0
    %445 = vmatpush1.bf16.msra.mxu0 %v426
    %446 = vmatprep.subr.bf16.mxu0 0
    %447 = vmatpush1.bf16.msra.mxu0 %v427
    %448 = vmatprep.subr.bf16.mxu0 0
    %449 = vmatpush1.bf16.msra.mxu0 %v428
    %450 = vmatprep.subr.bf16.mxu0 0
    %451 = vmatpush1.bf16.msra.mxu0 %v429
    %452 = vmatprep.subr.bf16.mxu0 0
    %453 = vmatpush1.bf16.msra.mxu0 %v430
    %454 = vmatprep.subr.bf16.mxu0 0
    %455 = vmatpush1.bf16.msra.mxu0 %v431
    %456 = vmatprep.subr.bf16.mxu0 0
    %457 = vmatpush1.bf16.msra.mxu0 0
    %458 = vmatprep.subr.bf16.mxu0 0
    %459 = vmatpush1.bf16.msra.mxu0 0
    %460 = vmatprep.subr.bf16.mxu0 0
    %461 = vmatpush1.bf16.msra.mxu0 0
    %462 = vmatprep.subr.bf16.mxu0 0
    %463 = vmatpush1.bf16.msra.mxu0 0
    %464 = vmatprep.subr.bf16.mxu0 0
    %465 = vmatpush1.bf16.msra.mxu0 0
    %466 = vmatprep.subr.bf16.mxu0 0
    %467 = vmatpush1.bf16.msra.mxu0 0
    %468 = vmatprep.subr.bf16.mxu0 0
    %469 = vmatpush1.bf16.msra.mxu0 0
    %470 = vmatprep.subr.bf16.mxu0 0
    %471 = vmatpush1.bf16.msra.mxu0 0
    %472 = vmatprep.mubr.bf16.mxu0 0
    %473 = vmatmul.mubr.bf16.gmra.mrb[0].mxu0 %v269
    %v474 = vpop.f32.mrb[0].mxu0
    %v475 = vadd.f32 %v387, %v474
    %v476 = vpop.f32.mrb[0].mxu0
    %v477 = vpop.f32.mrb[0].mxu0
    %v478 = vpop.f32.mrb[0].mxu0
    %479 = vdwg.mxu0
    %v480 = vld [vmem:[%s16] sm:$0x1]
    %v482 = vlaneseq
    %v483 = vshrl.u32 %v482, 7
    %v484 = vsub.s32 0, %v483
    %v485 = vrot.slane %v480, %v484
    %v487 = vadd.f32 %v475, %v485
    %v488 = vmax.f32 %v487, 0.0
    %v489 = vld [vmem:[%s17] sm:$0x1]
    %v491 = vlaneseq
    %v492 = vshrl.u32 %v491, 7
    %v493 = vsub.s32 0, %v492
    %v494 = vrot.slane %v489, %v493
    %v496 = vmul.f32 %v488, %v494
    %497 = vadd.xlane.f32.xlu0 %v496
    %v498 = vpop.xlane.xlu0 %497
    %v499 = vld [vmem:[#allocation5] sm:$0x1]
    %v501 = vlaneseq
    %v502 = vshrl.u32 %v501, 7
    %v503 = vsub.s32 0, %v502
    %v504 = vrot.slane %v499, %v503
    %v506 = vadd.f32 %v498, %v504
    %vm507 = vcmask 7168
    %508 = vst.msk [vmem:[%s26] sm:$0xff] %vm507, %v506
    %v509 = vlaneseq
    %v510 = vshrl.u32 %v509, 7
    %v511 = vld [vmem:[%s6] sm:$0x1]
    %v512 = vlaneseq
    %v513 = vshrl.u32 %v512, 7
    %v514 = vsub.s32 0, %v513
    %v515 = vrot.slane %v511, %v514
    %vm516 = vcmp.eq.s32.totalorder %v510, %v515
    %v517 = vsel %vm516, 1, 0
    %v518 = vcvt.s32.f32 %v517
    %v519 = vpack.c.bf16 %v518, %v518
    %v520 = vpack.c.bf16 %v488, %v488
    %vm521 = vcmask 64512
    %v523 = vsel %vm521, %v519, 0
    %vm525 = vcmask 1043456
    %v527 = vsel %vm525, %v520, 0
    %529 = vmatprep.subr.bf16.mxu0 0
    %530 = vmatpush1.bf16.msra.mxu0 %v527
    %531 = vmatprep.subr.bf16.mxu0 0
    %532 = vmatpush1.bf16.msra.mxu0 0
    %533 = vmatprep.subr.bf16.mxu0 0
    %534 = vmatpush1.bf16.msra.mxu0 0
    %535 = vmatprep.subr.bf16.mxu0 0
    %536 = vmatpush1.bf16.msra.mxu0 0
    %537 = vmatprep.subr.bf16.mxu0 0
    %538 = vmatpush1.bf16.msra.mxu0 0
    %539 = vmatprep.subr.bf16.mxu0 0
    %540 = vmatpush1.bf16.msra.mxu0 0
    %541 = vmatprep.subr.bf16.mxu0 0
    %542 = vmatpush1.bf16.msra.mxu0 0
    %543 = vmatprep.subr.bf16.mxu0 0
    %544 = vmatpush1.bf16.msra.mxu0 0
    %545 = vmatprep.subr.bf16.mxu0 0
    %546 = vmatpush1.bf16.msra.mxu0 0
    %547 = vmatprep.subr.bf16.mxu0 0
    %548 = vmatpush1.bf16.msra.mxu0 0
    %549 = vmatprep.subr.bf16.mxu0 0
    %550 = vmatpush1.bf16.msra.mxu0 0
    %551 = vmatprep.subr.bf16.mxu0 0
    %552 = vmatpush1.bf16.msra.mxu0 0
    %553 = vmatprep.subr.bf16.mxu0 0
    %554 = vmatpush1.bf16.msra.mxu0 0
    %555 = vmatprep.subr.bf16.mxu0 0
    %556 = vmatpush1.bf16.msra.mxu0 0
    %557 = vmatprep.subr.bf16.mxu0 0
    %558 = vmatpush1.bf16.msra.mxu0 0
    %559 = vmatprep.subr.bf16.mxu0 0
    %560 = vmatpush1.bf16.msra.mxu0 0
    %561 = vmatprep.mubr.bf16.mxu0 0
    %562 = vmatmul.mubr.bf16.gmra.mrb[0].mxu0 %v523
    %v563 = vpop.f32.mrb[0].mxu0
    %v564 = vadd.f32 0.0, %v563
    %v565 = vpop.f32.mrb[0].mxu0
    %v566 = vpop.f32.mrb[0].mxu0
    %v567 = vpop.f32.mrb[0].mxu0
    %568 = vdwg.mxu0
    %v569 = vld [vmem:[%s8] sm:$0xff]
    %571 = vset.pattern.permute.xlu0 0
    %572 = vperm.xlu0 %571, %v569
    %v573 = vpop.permute.xlu0 %572
    %v575 = vmul.f32 %v564, %v573
    %v576 = vld [vmem:[%s7] sm:$0x1]
    %v577 = vlaneseq
    %v578 = vshrl.u32 %v577, 7
    %v579 = vsub.s32 0, %v578
    %v580 = vrot.slane %v576, %v579
    %vm581 = vcmp.eq.s32.totalorder %v510, %v580
    %v582 = vsel %vm581, 1, 0
    %v583 = vcvt.s32.f32 %v582
    %v584 = vpack.c.bf16 %v583, %v583
    %v585 = vpack.c.bf16 %v247, %v246
    %vm586 = vcmask 130048
    %v588 = vsel %vm586, %v584, 0
    %590 = vmatprep.subr.bf16.mxu0 0
    %591 = vmatpush1.bf16.msra.mxu0 %v585
    %592 = vmatprep.subr.bf16.mxu0 0
    %593 = vmatpush1.bf16.msra.mxu0 0
    %594 = vmatprep.subr.bf16.mxu0 0
    %595 = vmatpush1.bf16.msra.mxu0 0
    %596 = vmatprep.subr.bf16.mxu0 0
    %597 = vmatpush1.bf16.msra.mxu0 0
    %598 = vmatprep.subr.bf16.mxu0 0
    %599 = vmatpush1.bf16.msra.mxu0 0
    %600 = vmatprep.subr.bf16.mxu0 0
    %601 = vmatpush1.bf16.msra.mxu0 0
    %602 = vmatprep.subr.bf16.mxu0 0
    %603 = vmatpush1.bf16.msra.mxu0 0
    %604 = vmatprep.subr.bf16.mxu0 0
    %605 = vmatpush1.bf16.msra.mxu0 0
    %606 = vmatprep.subr.bf16.mxu0 0
    %607 = vmatpush1.bf16.msra.mxu0 0
    %608 = vmatprep.subr.bf16.mxu0 0
    %609 = vmatpush1.bf16.msra.mxu0 0
    %610 = vmatprep.subr.bf16.mxu0 0
    %611 = vmatpush1.bf16.msra.mxu0 0
    %612 = vmatprep.subr.bf16.mxu0 0
    %613 = vmatpush1.bf16.msra.mxu0 0
    %614 = vmatprep.subr.bf16.mxu0 0
    %615 = vmatpush1.bf16.msra.mxu0 0
    %616 = vmatprep.subr.bf16.mxu0 0
    %617 = vmatpush1.bf16.msra.mxu0 0
    %618 = vmatprep.subr.bf16.mxu0 0
    %619 = vmatpush1.bf16.msra.mxu0 0
    %620 = vmatprep.subr.bf16.mxu0 0
    %621 = vmatpush1.bf16.msra.mxu0 0
    %622 = vmatprep.mubr.bf16.mxu0 0
    %623 = vmatmul.mubr.bf16.gmra.mrb[0].mxu0 %v588
    %v624 = vpop.f32.mrb[0].mxu0
    %v625 = vadd.f32 0.0, %v624
    %v626 = vpop.f32.mrb[0].mxu0
    %v627 = vpop.f32.mrb[0].mxu0
    %v628 = vpop.f32.mrb[0].mxu0
    %629 = vdwg.mxu0
    %v630 = vld [vmem:[%s9] sm:$0xff]
    %632 = vset.pattern.permute.xlu0 0
    %633 = vperm.xlu0 %632, %v630
    %v634 = vpop.permute.xlu0 %633
    %v636 = vmul.f32 %v625, %v634
    %v637 = vpack.c.bf16 %v575, %v575
    %v638 = vld [vmem:[%s19] sm:$0xf]
    %v639 = vld [vmem:[%s19 + $0x4] sm:$0xf]
    %v640 = vld [vmem:[%s19 + $0x8] sm:$0xf]
    %v641 = vld [vmem:[%s19 + $0xc] sm:$0xf]
    %v642 = vld [vmem:[%s19 + $0x10] sm:$0xf]
    %v643 = vld [vmem:[%s19 + $0x14] sm:$0xf]
    %v644 = vld [vmem:[%s19 + $0x18] sm:$0xf]
    %v645 = vld [vmem:[%s19 + $0x1c] sm:$0xf]
    %v646 = vld [vmem:[%s19 + $0x20] sm:$0xf]
    %v647 = vld [vmem:[%s19 + $0x24] sm:$0xf]
    %v648 = vld [vmem:[%s19 + $0x28] sm:$0xf]
    %v649 = vld [vmem:[%s19 + $0x2c] sm:$0xf]
    %v650 = vld [vmem:[%s19 + $0x30] sm:$0xf]
    %v651 = vld [vmem:[%s19 + $0x34] sm:$0xf]
    %v652 = vld [vmem:[%s19 + $0x38] sm:$0xf]
    %v653 = vld [vmem:[%s19 + $0x3c] sm:$0xf]
    %v654 = vpack.c.bf16 %v636, %v636
    %v655 = vld [vmem:[%s20] sm:$0xf]
    %v656 = vld [vmem:[%s20 + $0x4] sm:$0xf]
    %v657 = vld [vmem:[%s20 + $0x8] sm:$0xf]
    %v658 = vld [vmem:[%s20 + $0xc] sm:$0xf]
    %v659 = vld [vmem:[%s20 + $0x10] sm:$0xf]
    %v660 = vld [vmem:[%s20 + $0x14] sm:$0xf]
    %v661 = vld [vmem:[%s20 + $0x18] sm:$0xf]
    %v662 = vld [vmem:[%s20 + $0x1c] sm:$0xf]
    %v663 = vld [vmem:[%s20 + $0x20] sm:$0xf]
    %v664 = vld [vmem:[%s20 + $0x24] sm:$0xf]
    %v665 = vld [vmem:[%s20 + $0x28] sm:$0xf]
    %v666 = vld [vmem:[%s20 + $0x2c] sm:$0xf]
    %v667 = vld [vmem:[%s20 + $0x30] sm:$0xf]
    %v668 = vld [vmem:[%s20 + $0x34] sm:$0xf]
    %v669 = vld [vmem:[%s20 + $0x38] sm:$0xf]
    %v670 = vld [vmem:[%s20 + $0x3c] sm:$0xf]
    %v687 = vunpack.c.l.b16 %v655
    %v688 = vunpack.c.l.b16 %v656
    %v689 = vunpack.c.l.b16 %v657
    %v690 = vunpack.c.l.b16 %v658
    %v691 = vunpack.c.l.b16 %v659
    %v692 = vunpack.c.l.b16 %v660
    %v693 = vunpack.c.l.b16 %v661
    %v694 = vunpack.c.l.b16 %v662
    %v695 = vunpack.c.l.b16 %v663
    %v696 = vunpack.c.l.b16 %v664
    %v697 = vunpack.c.l.b16 %v665
    %v698 = vunpack.c.l.b16 %v666
    %v699 = vunpack.c.l.b16 %v667
    %v700 = vunpack.c.l.b16 %v668
    %v701 = vunpack.c.l.b16 %v669
    %v702 = vunpack.c.l.b16 %v670
    %v703 = vpack.c.b16 %v688, %v687
    %v704 = vpack.c.b16 %v690, %v689
    %v705 = vpack.c.b16 %v692, %v691
    %v706 = vpack.c.b16 %v694, %v693
    %v707 = vpack.c.b16 %v696, %v695
    %v708 = vpack.c.b16 %v698, %v697
    %v709 = vpack.c.b16 %v700, %v699
    %v710 = vpack.c.b16 %v702, %v701
    %719 = vmatprep.subr.bf16.mxu0 0
    %720 = vmatpush1.bf16.msra.mxu0 %v703
    %721 = vmatprep.subr.bf16.mxu0 0
    %722 = vmatpush1.bf16.msra.mxu0 %v704
    %723 = vmatprep.subr.bf16.mxu0 0
    %724 = vmatpush1.bf16.msra.mxu0 %v705
    %725 = vmatprep.subr.bf16.mxu0 0
    %726 = vmatpush1.bf16.msra.mxu0 %v706
    %727 = vmatprep.subr.bf16.mxu0 0
    %728 = vmatpush1.bf16.msra.mxu0 %v707
    %729 = vmatprep.subr.bf16.mxu0 0
    %730 = vmatpush1.bf16.msra.mxu0 %v708
    %731 = vmatprep.subr.bf16.mxu0 0
    %732 = vmatpush1.bf16.msra.mxu0 %v709
    %733 = vmatprep.subr.bf16.mxu0 0
    %734 = vmatpush1.bf16.msra.mxu0 %v710
    %735 = vmatprep.subr.bf16.mxu0 0
    %736 = vmatpush1.bf16.msra.mxu0 0
    %737 = vmatprep.subr.bf16.mxu0 0
    %738 = vmatpush1.bf16.msra.mxu0 0
    %739 = vmatprep.subr.bf16.mxu0 0
    %740 = vmatpush1.bf16.msra.mxu0 0
    %741 = vmatprep.subr.bf16.mxu0 0
    %742 = vmatpush1.bf16.msra.mxu0 0
    %743 = vmatprep.subr.bf16.mxu0 0
    %744 = vmatpush1.bf16.msra.mxu0 0
    %745 = vmatprep.subr.bf16.mxu0 0
    %746 = vmatpush1.bf16.msra.mxu0 0
    %747 = vmatprep.subr.bf16.mxu0 0
    %748 = vmatpush1.bf16.msra.mxu0 0
    %749 = vmatprep.subr.bf16.mxu0 0
    %750 = vmatpush1.bf16.msra.mxu0 0
    %751 = vmatprep.mubr.bf16.mxu0 0
    %752 = vmatmul.mubr.bf16.gmra.mrb[0].mxu0 %v654
    %v753 = vpop.f32.mrb[0].mxu0
    %v754 = vadd.f32 0.0, %v753
    %v755 = vpop.f32.mrb[0].mxu0
    %v756 = vpop.f32.mrb[0].mxu0
    %v757 = vpop.f32.mrb[0].mxu0
    %758 = vdwg.mxu0
    %v775 = vunpack.c.l.b16 %v638
    %v776 = vunpack.c.l.b16 %v639
    %v777 = vunpack.c.l.b16 %v640
    %v778 = vunpack.c.l.b16 %v641
    %v779 = vunpack.c.l.b16 %v642
    %v780 = vunpack.c.l.b16 %v643
    %v781 = vunpack.c.l.b16 %v644
    %v782 = vunpack.c.l.b16 %v645
    %v783 = vunpack.c.l.b16 %v646
    %v784 = vunpack.c.l.b16 %v647
    %v785 = vunpack.c.l.b16 %v648
    %v786 = vunpack.c.l.b16 %v649
    %v787 = vunpack.c.l.b16 %v650
    %v788 = vunpack.c.l.b16 %v651
    %v789 = vunpack.c.l.b16 %v652
    %v790 = vunpack.c.l.b16 %v653
    %v791 = vpack.c.b16 %v776, %v775
    %v792 = vpack.c.b16 %v778, %v777
    %v793 = vpack.c.b16 %v780, %v779
    %v794 = vpack.c.b16 %v782, %v781
    %v795 = vpack.c.b16 %v784, %v783
    %v796 = vpack.c.b16 %v786, %v785
    %v797 = vpack.c.b16 %v788, %v787
    %v798 = vpack.c.b16 %v790, %v789
    %807 = vmatprep.subr.bf16.mxu0 0
    %808 = vmatpush1.bf16.msra.mxu0 %v791
    %809 = vmatprep.subr.bf16.mxu0 0
    %810 = vmatpush1.bf16.msra.mxu0 %v792
    %811 = vmatprep.subr.bf16.mxu0 0
    %812 = vmatpush1.bf16.msra.mxu0 %v793
    %813 = vmatprep.subr.bf16.mxu0 0
    %814 = vmatpush1.bf16.msra.mxu0 %v794
    %815 = vmatprep.subr.bf16.mxu0 0
    %816 = vmatpush1.bf16.msra.mxu0 %v795
    %817 = vmatprep.subr.bf16.mxu0 0
    %818 = vmatpush1.bf16.msra.mxu0 %v796
    %819 = vmatprep.subr.bf16.mxu0 0
    %820 = vmatpush1.bf16.msra.mxu0 %v797
    %821 = vmatprep.subr.bf16.mxu0 0
    %822 = vmatpush1.bf16.msra.mxu0 %v798
    %823 = vmatprep.subr.bf16.mxu0 0
    %824 = vmatpush1.bf16.msra.mxu0 0
    %825 = vmatprep.subr.bf16.mxu0 0
    %826 = vmatpush1.bf16.msra.mxu0 0
    %827 = vmatprep.subr.bf16.mxu0 0
    %828 = vmatpush1.bf16.msra.mxu0 0
    %829 = vmatprep.subr.bf16.mxu0 0
    %830 = vmatpush1.bf16.msra.mxu0 0
    %831 = vmatprep.subr.bf16.mxu0 0
    %832 = vmatpush1.bf16.msra.mxu0 0
    %833 = vmatprep.subr.bf16.mxu0 0
    %834 = vmatpush1.bf16.msra.mxu0 0
    %835 = vmatprep.subr.bf16.mxu0 0
    %836 = vmatpush1.bf16.msra.mxu0 0
    %837 = vmatprep.subr.bf16.mxu0 0
    %838 = vmatpush1.bf16.msra.mxu0 0
    %839 = vmatprep.mubr.bf16.mxu0 0
    %840 = vmatmul.mubr.bf16.gmra.mrb[0].mxu0 %v637
    %v841 = vpop.f32.mrb[0].mxu0
    %v842 = vadd.f32 %v754, %v841
    %v843 = vpop.f32.mrb[0].mxu0
    %v844 = vpop.f32.mrb[0].mxu0
    %v845 = vpop.f32.mrb[0].mxu0
    %846 = vdwg.mxu0
    %v847 = vld [vmem:[%s2] sm:$0xff]
    %v848 = vld [vmem:[%s21] sm:$0xf]
    %850 = vset.pattern.permute.xlu0 0
    %851 = vperm.xlu0 %850, %v847
    %v852 = vpop.permute.xlu0 %851
    %v854 = vlaneseq
    %v855 = vshrl.u32 %v854, 7
    %v856 = vsub.s32 0, %v855
    %v857 = vrot.slane %v848, %v856
    %v858 = vmul.f32 %v852, %v857
    %859 = vset.pattern.permute.xlu0 1
    %860 = vperm.xlu0 %859, %v847
    %v861 = vpop.permute.xlu0 %860
    %v863 = vlaneseq
    %v864 = vshrl.u32 %v863, 7
    %v865 = vsub.s32 1, %v864
    %v866 = vrot.slane %v848, %v865
    %v867 = vmul.f32 %v861, %v866
    %v868 = vadd.f32 %v858, %v867
    %869 = vset.pattern.permute.xlu0 2
    %870 = vperm.xlu0 %869, %v847
    %v871 = vpop.permute.xlu0 %870
    %v873 = vlaneseq
    %v874 = vshrl.u32 %v873, 7
    %v875 = vsub.s32 2, %v874
    %v876 = vrot.slane %v848, %v875
    %v877 = vmul.f32 %v871, %v876
    %v878 = vadd.f32 %v868, %v877
    %879 = vset.pattern.permute.xlu0 3
    %880 = vperm.xlu0 %879, %v847
    %v881 = vpop.permute.xlu0 %880
    %v883 = vlaneseq
    %v884 = vshrl.u32 %v883, 7
    %v885 = vsub.s32 3, %v884
    %v886 = vrot.slane %v848, %v885
    %v887 = vmul.f32 %v881, %v886
    %v888 = vadd.f32 %v878, %v887
    %v889 = vadd.f32 %v842, %v888
    %v890 = vld [vmem:[%s3] sm:$0xff]
    %v891 = vld [vmem:[%s22] sm:$0x3]
    %893 = vset.pattern.permute.xlu0 0
    %894 = vperm.xlu0 %893, %v890
    %v895 = vpop.permute.xlu0 %894
    %v897 = vlaneseq
    %v898 = vshrl.u32 %v897, 7
    %v899 = vsub.s32 0, %v898
    %v900 = vrot.slane %v891, %v899
    %v901 = vmul.f32 %v895, %v900
    %902 = vset.pattern.permute.xlu0 1
    %903 = vperm.xlu0 %902, %v890
    %v904 = vpop.permute.xlu0 %903
    %v906 = vlaneseq
    %v907 = vshrl.u32 %v906, 7
    %v908 = vsub.s32 1, %v907
    %v909 = vrot.slane %v891, %v908
    %v910 = vmul.f32 %v904, %v909
    %v911 = vadd.f32 %v901, %v910
    %v912 = vadd.f32 %v889, %v911
    %v913 = vld [vmem:[%s23] sm:$0x1]
    %v915 = vlaneseq
    %v916 = vshrl.u32 %v915, 7
    %v917 = vsub.s32 0, %v916
    %v918 = vrot.slane %v913, %v917
    %v920 = vadd.f32 %v912, %v918
    %v921 = vmax.f32 %v920, 0.0
    %v922 = vld [vmem:[%s24] sm:$0x1]
    %v924 = vlaneseq
    %v925 = vshrl.u32 %v924, 7
    %v926 = vsub.s32 0, %v925
    %v927 = vrot.slane %v922, %v926
    %v929 = vmul.f32 %v921, %v927
    %930 = vadd.xlane.f32.xlu0 %v929
    %v931 = vpop.xlane.xlu0 %930
    %v932 = vld [vmem:[#allocation6] sm:$0x1]
    %v934 = vlaneseq
    %v935 = vshrl.u32 %v934, 7
    %v936 = vsub.s32 0, %v935
    %v937 = vrot.slane %v932, %v936
    %v939 = vadd.f32 %v931, %v937
    %940 = vst.msk [vmem:[%s27] sm:$0xff] %vm507, %v939
    // Predicated region
    $region121: #{fused_forward.1} parent=1 // pred_check
      _
    $region122: #{fused_forward.1} parent=1 // pred_check_branch
      %942 = sbr.rel (0) target = $region124
    $region123: #{fused_forward.1} parent=1 // pred_region
      _
    $region124: #{fused_forward.1} parent=1 // pred_fallthru
      _
    // Predicated region
    $region125: #{fused_forward.1} parent=1 // pred_check
      _
    $region126: #{fused_forward.1} parent=1 // pred_check_branch
      %944 = sbr.rel (0) target = $region128
    $region127: #{fused_forward.1} parent=1 // pred_region
      _
    $region128: #{fused_forward.1} parent=1 // pred_fallthru
      _
    // Predicated region
    $region129: #{fused_forward.1} parent=1 // pred_check
      _
    $region130: #{fused_forward.1} parent=1 // pred_check_branch
      %946 = sbr.rel (0) target = $region132
    $region131: #{fused_forward.1} parent=1 // pred_region
      _
    $region132: #{fused_forward.1} parent=1 // pred_fallthru
      _
    // Predicated region
    $region133: #{fused_forward.1} parent=1 // pred_check
      _
    $region134: #{fused_forward.1} parent=1 // pred_check_branch
      %948 = sbr.rel (0) target = $region136
    $region135: #{fused_forward.1} parent=1 // pred_region
      _
    $region136: #{fused_forward.1} parent=1 // pred_fallthru
      _
    %949 = vsyncpa [#allocation8], 1
    %950 = vsyncpa [#allocation10], 1

</llo_original>
